<compile_context>
chip_gen: v7x
topology: tpu7x:2x2x1
jax: 0.10.0
libtpu: 0.0.40
codegen_flags: <defaults>
</compile_context>

<pallas_src>
import jax
import jax.numpy as jnp
import numpy as np
from jax.experimental import pallas as pl
from jax.experimental.pallas import tpu as pltpu

VMEM_LIMIT = 48 * 1024 * 1024  # <= v7x 64 MiB physical (headroom); fine on v5e/v6e


def _round_up(x, m):
    return (x + m - 1) // m * m


def _pick_samples_per_tile(n, rows_per_sample, target_rows=512):
    """Samples per conv grid step: ~target_rows rows/tile, grid >= 2 (v7x megacore),
    must divide n, and the row tile must stay sublane (8) aligned."""
    tb = max(1, min(n, max(1, target_rows // max(1, rows_per_sample))))
    if n >= 2:
        tb = min(tb, max(1, n // 2))      # keep >= 2 grid steps for v7x's 2 TCs
    while n % tb:
        tb -= 1
    if (tb * rows_per_sample) % 8 != 0 and tb != n:
        return n                          # fall back to one full block if unaligned
    return tb


def _pick_mlp_batch_tile(n, target_rows=512):
    """Batch rows per MLP grid step (multiple of 8 when tiling, else full batch)."""
    if n % 8 == 0 and n > 8:
        tb = min(n, target_rows)
        if n >= 16:
            tb = min(tb, n // 2)          # >= 2 grid steps for v7x megacore
        tb -= tb % 8
        tb = max(tb, 8)
        while n % tb:
            tb -= 8
        return tb
    return n


# --------------------------------------------------------------------------
# Kernel A: fused conv (im2col matmul) + bias + ReLU + 2x2 max-pool.
#   p_ref: (4, R, CKKp)  -- leading dim enumerates the 2x2 pool-window offsets
#   w_ref: (CKKp, F)   b_ref: (1, F)   o_ref: (R, F)   [R = tb*H2*W2]
# Bias+ReLU are applied ONCE after the 4-way max (monotonicity => identical).
# --------------------------------------------------------------------------
def conv_relu_pool_kernel(p_ref, w_ref, b_ref, o_ref):
    w = w_ref[...]
    a = jnp.dot(p_ref[0], w, preferred_element_type=jnp.float32)
    a = jnp.maximum(a, jnp.dot(p_ref[1], w, preferred_element_type=jnp.float32))
    a = jnp.maximum(a, jnp.dot(p_ref[2], w, preferred_element_type=jnp.float32))
    a = jnp.maximum(a, jnp.dot(p_ref[3], w, preferred_element_type=jnp.float32))
    o_ref[...] = jnp.maximum(a + b_ref[...], 0.0)


# --------------------------------------------------------------------------
# Kernel B: fc1 + (dropout p=0 == identity) + ReLU + fc2, fully fused.
#   f_ref: (tb, D)  w1: (D, Hd)  b1: (1, Hd)  w2: (Hd, NC)  b2: (1, NC)
# --------------------------------------------------------------------------
def mlp_kernel(f_ref, w1_ref, b1_ref, w2_ref, b2_ref, o_ref):
    h = jnp.dot(f_ref[...], w1_ref[...], preferred_element_type=jnp.float32)
    h = jnp.maximum(h + b1_ref[...], 0.0)
    o_ref[...] = jnp.dot(h, w2_ref[...], preferred_element_type=jnp.float32) + b2_ref[...]


def classification_cnn_forward(x, params, *, kernel_size=7, pool=2, stride_pool=2):
    """Pallas forward pass. x: (N, C, H, W) float32 (PyTorch NCHW)."""
    N, C, H, W = x.shape
    conv_w = params["conv_w"]            # (F, C, K, K)
    conv_b = params["conv_b"]            # (F,)
    fc1_w = params["fc1_w"]              # (hidden, F*H2*W2)  NCHW flatten order
    fc1_b = params["fc1_b"]              # (hidden,)
    fc2_w = params["fc2_w"]              # (num_classes, hidden)
    fc2_b = params["fc2_b"]              # (num_classes,)

    K = kernel_size
    Fn = conv_w.shape[0]
    Hd = fc1_w.shape[0]
    NC = fc2_w.shape[0]
    padz = (K - 1) // 2                  # "same" padding (odd K, matches the module)
    assert pool == 2 and stride_pool == 2, "kernel specialized to 2x2/stride-2 max pool"
    assert H % 2 == 0 and W % 2 == 0, "even spatial dims expected (PyTorch would truncate)"
    H2, W2 = H // 2, W // 2
    S = H2 * W2

    SUB = 8
    CKK = C * K * K
    CKKp = _round_up(CKK, SUB)           # sublane-aligned contraction dim
    D = S * Fn                           # true flattened pooled-feature dim (no padding)

    f32 = jnp.float32
    x = x.astype(f32)

    # ---- glue: NCHW -> NHWC, pad, im2col (feature order (c, ky, kx)), group by pool offset ----
    x_nhwc = jnp.transpose(x, (0, 2, 3, 1))
    x_pad = jnp.pad(x_nhwc, ((0, 0), (padz, padz), (padz, padz), (0, 0)))
    cols = [x_pad[:, ky:ky + H, kx:kx + W, :] for ky in range(K) for kx in range(K)]
    patches = jnp.stack(cols, axis=-1)                       # (N, H, W, C, K*K)
    patches = patches.reshape(N, H, W, CKK)                  # feature = c*K*K + ky*K + kx
    patches = jnp.pad(patches, ((0, 0), (0, 0), (0, 0), (0, CKKp - CKK)))
    patches = patches.reshape(N, H2, 2, W2, 2, CKKp)         # (n, h2, dy, w2, dx, ckk)
    patches = jnp.transpose(patches, (2, 4, 0, 1, 3, 5))     # (dy, dx, n, h2, w2, ckk)
    patches = patches.reshape(4, N * S, CKKp)

    wc = conv_w.reshape(Fn, CKK).T.astype(f32)               # (CKK, F)
    wc = jnp.pad(wc, ((0, CKKp - CKK), (0, 0)))
    bc = conv_b.astype(f32).reshape(1, Fn)

    # ---- kernel A: conv + relu + pool, tiled over batch, pooled channels unpadded ----
    tb = _pick_samples_per_tile(N, S, target_rows=512)
    R = tb * S
    pooled = pl.pallas_call(
        conv_relu_pool_kernel,
        out_shape=jax.ShapeDtypeStruct((N * S, Fn), f32),
        grid=(N // tb,),
        in_specs=[
            pl.BlockSpec((4, R, CKKp), lambda i: (0, i, 0)),   # streamed per batch tile
            pl.BlockSpec((CKKp, Fn), lambda i: (0, 0)),        # resident weights
            pl.BlockSpec((1, Fn), lambda i: (0, 0)),
        ],
        out_specs=pl.BlockSpec((R, Fn), lambda i: (i, 0)),
        compiler_params=pltpu.CompilerParams(
            dimension_semantics=("parallel",),
            vmem_limit_bytes=VMEM_LIMIT),
    )(patches, wc, bc)

    # ---- glue: contiguous (free) flatten + repack fc weights into kernel layout ----
    feats = pooled.reshape(N, D)                             # feature = (h2*W2 + w2)*Fn + f

    w1r = fc1_w.astype(f32).reshape(Hd, Fn, H2, W2)          # undo NCHW flatten order
    w1r = jnp.transpose(w1r, (2, 3, 1, 0))                   # (h2, w2, f, hd)
    w1p = w1r.reshape(D, Hd)
    b1p = fc1_b.astype(f32).reshape(1, Hd)
    w2p = fc2_w.astype(f32).T                                # (Hd, NC)
    b2p = fc2_b.astype(f32).reshape(1, NC)

    # ---- kernel B: fc1 + relu + fc2 (no padded dims), batch-tiled when large ----
    tbm = _pick_mlp_batch_tile(N)
    out = pl.pallas_call(
        mlp_kernel,
        out_shape=jax.ShapeDtypeStruct((N, NC), f32),
        grid=(N // tbm,),
        in_specs=[
            pl.BlockSpec((tbm, D), lambda i: (i, 0)),
            pl.BlockSpec((D, Hd), lambda i: (0, 0)),
            pl.BlockSpec((1, Hd), lambda i: (0, 0)),
            pl.BlockSpec((Hd, NC), lambda i: (0, 0)),
            pl.BlockSpec((1, NC), lambda i: (0, 0)),
        ],
        out_specs=pl.BlockSpec((tbm, NC), lambda i: (i, 0)),
        compiler_params=pltpu.CompilerParams(
            dimension_semantics=("parallel",),
            vmem_limit_bytes=VMEM_LIMIT),
    )(feats, w1p, b1p, w2p, b2p)

    return out


def reference_forward(x, params, *, kernel_size=7, pool=2, stride_pool=2):
    """Pure-JAX reference mirroring the PyTorch module (eval mode, p=0 dropout)."""
    N, C, H, W = x.shape
    K = kernel_size
    padz = (K - 1) // 2
    Fn = params["conv_w"].shape[0]
    conv = jax.lax.conv_general_dilated(
        x, params["conv_w"], (1, 1), [(padz, padz), (padz, padz)],
        dimension_numbers=("NCHW", "OIHW", "NCHW"),
        precision=jax.lax.Precision.HIGHEST,
    ) + params["conv_b"][None, :, None, None]
    h = jnp.maximum(conv, 0.0)
    H2, W2 = (H - pool) // stride_pool + 1, (W - pool) // stride_pool + 1
    p = h.reshape(N, Fn, H2, pool, W2, pool).max(axis=(3, 5))
    f = p.reshape(N, -1)
    h1 = jnp.maximum(f @ params["fc1_w"].T + params["fc1_b"], 0.0)
    return h1 @ params["fc2_w"].T + params["fc2_b"]


if __name__ == "__main__":
    # Small-shape configuration consistent with the module's __init__.
    N, C, H, W = 4, 3, 16, 16
    num_filters, kernel_size = 8, 7
    pool, stride_pool = 2, 2
    hidden_dim, num_classes = 32, 10
    weight_scale = 0.001
    H2, W2 = H // 2, W // 2
    D = num_filters * H2 * W2

    key = jax.random.PRNGKey(0)
    kx, k1, k2, k3, k4, k5, k6 = jax.random.split(key, 7)

    x = jax.random.normal(kx, (N, C, H, W), dtype=jnp.float32)
    params = {
        # conv1 weights scaled by weight_scale, mirroring `.data.mul_(weight_scale)`
        "conv_w": jax.random.normal(k1, (num_filters, C, kernel_size, kernel_size),
                                    dtype=jnp.float32) * weight_scale,
        "conv_b": jax.random.normal(k2, (num_filters,), dtype=jnp.float32) * 0.01,
        "fc1_w": jax.random.normal(k3, (hidden_dim, D), dtype=jnp.float32) * 0.1,
        "fc1_b": jax.random.normal(k4, (hidden_dim,), dtype=jnp.float32) * 0.1,
        "fc2_w": jax.random.normal(k5, (num_classes, hidden_dim), dtype=jnp.float32) * 0.1,
        "fc2_b": jax.random.normal(k6, (num_classes,), dtype=jnp.float32) * 0.1,
    }

    fwd = jax.jit(lambda xx, pp: classification_cnn_forward(
        xx, pp, kernel_size=kernel_size, pool=pool, stride_pool=stride_pool))

    out = jax.block_until_ready(fwd(x, params))
    assert out.shape == (N, num_classes) and out.dtype == jnp.float32

    ref = jax.block_until_ready(
        reference_forward(x, params, kernel_size=kernel_size,
                          pool=pool, stride_pool=stride_pool))
    np.testing.assert_allclose(np.asarray(out), np.asarray(ref), rtol=1e-3, atol=1e-4)

    print("KERNEL_OK")
</pallas_src>

<mosaic_0001>
module attributes {stable_mosaic.version = 11 : i64} {
  func.func @conv_relu_pool_kernel(%arg0: i32, %arg1: memref<4x128x152xf32, #tpu.memory_space<vmem>>, %arg2: memref<152x8xf32, #tpu.memory_space<vmem>>, %arg3: memref<1x8xf32, #tpu.memory_space<vmem>>, %arg4: memref<128x8xf32, #tpu.memory_space<vmem>>) attributes {dimension_semantics = [#tpu.dimension_semantics<parallel>], iteration_bounds = array<i64: 2>, scalar_prefetch = 0 : i64, scratch_operands = 0 : i64, tpu.core_type = #tpu.core_type<tc>, window_params = [{transform_indices = @transform_0, window_bounds = array<i64: 4, 128, 152>}, {pipeline_mode = #tpu.pipeline_mode<synchronous>, transform_indices = @transform_1, window_bounds = array<i64: 152, 8>}, {pipeline_mode = #tpu.pipeline_mode<synchronous>, transform_indices = @transform_2, window_bounds = array<i64: 1, 8>}, {transform_indices = @transform_3, window_bounds = array<i64: 128, 8>}]} {
    %c0 = arith.constant 0 : index
    %c0_0 = arith.constant 0 : index
    %0 = vector.load %arg2[%c0, %c0_0] : memref<152x8xf32, #tpu.memory_space<vmem>>, vector<152x8xf32>
    %c0_1 = arith.constant 0 : index
    %c0_2 = arith.constant 0 : index
    %c0_3 = arith.constant 0 : index
    %1 = vector.load %arg1[%c0_1, %c0_2, %c0_3] : memref<4x128x152xf32, #tpu.memory_space<vmem>>, vector<1x128x152xf32>
    %2 = vector.shape_cast %1 : vector<1x128x152xf32> to vector<128x152xf32>
    %cst = arith.constant dense<0.000000e+00> : vector<128x8xf32>
    %3 = tpu.matmul %2, %0, %cst {dimension_numbers = #tpu.dot_dimension_numbers<[1], [0], [0], [1], [0, 0, 1, 1], [], []>} : vector<128x152xf32>, vector<152x8xf32>, vector<128x8xf32> -> vector<128x8xf32>
    %c1 = arith.constant 1 : index
    %c0_4 = arith.constant 0 : index
    %c0_5 = arith.constant 0 : index
    %4 = vector.load %arg1[%c1, %c0_4, %c0_5] : memref<4x128x152xf32, #tpu.memory_space<vmem>>, vector<1x128x152xf32>
    %5 = vector.shape_cast %4 : vector<1x128x152xf32> to vector<128x152xf32>
    %cst_6 = arith.constant dense<0.000000e+00> : vector<128x8xf32>
    %6 = tpu.matmul %5, %0, %cst_6 {dimension_numbers = #tpu.dot_dimension_numbers<[1], [0], [0], [1], [0, 0, 1, 1], [], []>} : vector<128x152xf32>, vector<152x8xf32>, vector<128x8xf32> -> vector<128x8xf32>
    %7 = arith.maximumf %3, %6 : vector<128x8xf32>
    %c2 = arith.constant 2 : index
    %c0_7 = arith.constant 0 : index
    %c0_8 = arith.constant 0 : index
    %8 = vector.load %arg1[%c2, %c0_7, %c0_8] : memref<4x128x152xf32, #tpu.memory_space<vmem>>, vector<1x128x152xf32>
    %9 = vector.shape_cast %8 : vector<1x128x152xf32> to vector<128x152xf32>
    %cst_9 = arith.constant dense<0.000000e+00> : vector<128x8xf32>
    %10 = tpu.matmul %9, %0, %cst_9 {dimension_numbers = #tpu.dot_dimension_numbers<[1], [0], [0], [1], [0, 0, 1, 1], [], []>} : vector<128x152xf32>, vector<152x8xf32>, vector<128x8xf32> -> vector<128x8xf32>
    %11 = arith.maximumf %7, %10 : vector<128x8xf32>
    %c3 = arith.constant 3 : index
    %c0_10 = arith.constant 0 : index
    %c0_11 = arith.constant 0 : index
    %12 = vector.load %arg1[%c3, %c0_10, %c0_11] : memref<4x128x152xf32, #tpu.memory_space<vmem>>, vector<1x128x152xf32>
    %13 = vector.shape_cast %12 : vector<1x128x152xf32> to vector<128x152xf32>
    %cst_12 = arith.constant dense<0.000000e+00> : vector<128x8xf32>
    %14 = tpu.matmul %13, %0, %cst_12 {dimension_numbers = #tpu.dot_dimension_numbers<[1], [0], [0], [1], [0, 0, 1, 1], [], []>} : vector<128x152xf32>, vector<152x8xf32>, vector<128x8xf32> -> vector<128x8xf32>
    %15 = arith.maximumf %11, %14 : vector<128x8xf32>
    %c0_13 = arith.constant 0 : index
    %c0_14 = arith.constant 0 : index
    %16 = vector.load %arg3[%c0_13, %c0_14] : memref<1x8xf32, #tpu.memory_space<vmem>>, vector<1x8xf32>
    %17 = vector.broadcast %16 : vector<1x8xf32> to vector<128x8xf32>
    %18 = arith.addf %15, %17 : vector<128x8xf32>
    %cst_15 = arith.constant 0.000000e+00 : f32
    %19 = vector.broadcast %cst_15 : f32 to vector<128x8xf32>
    %20 = arith.maximumf %18, %19 : vector<128x8xf32>
    %c0_16 = arith.constant 0 : index
    %c0_17 = arith.constant 0 : index
    %21 = vector.load %arg4[%c0_16, %c0_17] : memref<128x8xf32, #tpu.memory_space<vmem>>, vector<128x8xf32>
    tpu.vector_store %arg4[%c0_16, %c0_17], %20 {strides = array<i32>} : memref<128x8xf32, #tpu.memory_space<vmem>>, vector<128x8xf32>,
    return
  }
  func.func @transform_0(%arg0: i32) -> (i32, i32, i32) {
    %c0_i32 = arith.constant 0 : i32
    %c0_i32_0 = arith.constant 0 : i32
    %c0_i32_1 = arith.constant 0 : i32
    return %c0_i32, %arg0, %c0_i32_0 : i32, i32, i32
  }
  func.func @transform_1(%arg0: i32) -> (i32, i32) {
    %c0_i32 = arith.constant 0 : i32
    %c0_i32_0 = arith.constant 0 : i32
    %c0_i32_1 = arith.constant 0 : i32
    return %c0_i32, %c0_i32_0 : i32, i32
  }
  func.func @transform_2(%arg0: i32) -> (i32, i32) {
    %c0_i32 = arith.constant 0 : i32
    %c0_i32_0 = arith.constant 0 : i32
    %c0_i32_1 = arith.constant 0 : i32
    return %c0_i32, %c0_i32_0 : i32, i32
  }
  func.func @transform_3(%arg0: i32) -> (i32, i32) {
    %c0_i32 = arith.constant 0 : i32
    %c0_i32_0 = arith.constant 0 : i32
    return %arg0, %c0_i32 : i32, i32
  }
}

module attributes {stable_mosaic.version = 11 : i64} {
  func.func @mlp_kernel(%arg0: i32, %arg1: memref<4x512xf32, #tpu.memory_space<vmem>>, %arg2: memref<512x32xf32, #tpu.memory_space<vmem>>, %arg3: memref<1x32xf32, #tpu.memory_space<vmem>>, %arg4: memref<32x10xf32, #tpu.memory_space<vmem>>, %arg5: memref<1x10xf32, #tpu.memory_space<vmem>>, %arg6: memref<4x10xf32, #tpu.memory_space<vmem>>) attributes {dimension_semantics = [#tpu.dimension_semantics<parallel>], iteration_bounds = array<i64: 1>, scalar_prefetch = 0 : i64, scratch_operands = 0 : i64, tpu.core_type = #tpu.core_type<tc>, window_params = [{transform_indices = @transform_0, window_bounds = array<i64: 4, 512>}, {pipeline_mode = #tpu.pipeline_mode<synchronous>, transform_indices = @transform_1, window_bounds = array<i64: 512, 32>}, {pipeline_mode = #tpu.pipeline_mode<synchronous>, transform_indices = @transform_2, window_bounds = array<i64: 1, 32>}, {pipeline_mode = #tpu.pipeline_mode<synchronous>, transform_indices = @transform_3, window_bounds = array<i64: 32, 10>}, {pipeline_mode = #tpu.pipeline_mode<synchronous>, transform_indices = @transform_4, window_bounds = array<i64: 1, 10>}, {transform_indices = @transform_5, window_bounds = array<i64: 4, 10>}]} {
    %c0 = arith.constant 0 : index
    %c0_0 = arith.constant 0 : index
    %0 = vector.load %arg1[%c0, %c0_0] : memref<4x512xf32, #tpu.memory_space<vmem>>, vector<4x512xf32>
    %c0_1 = arith.constant 0 : index
    %c0_2 = arith.constant 0 : index
    %1 = vector.load %arg2[%c0_1, %c0_2] : memref<512x32xf32, #tpu.memory_space<vmem>>, vector<512x32xf32>
    %cst = arith.constant dense<0.000000e+00> : vector<4x32xf32>
    %2 = tpu.matmul %0, %1, %cst {dimension_numbers = #tpu.dot_dimension_numbers<[1], [0], [0], [1], [0, 0, 1, 1], [], []>} : vector<4x512xf32>, vector<512x32xf32>, vector<4x32xf32> -> vector<4x32xf32>
    %c0_3 = arith.constant 0 : index
    %c0_4 = arith.constant 0 : index
    %3 = vector.load %arg3[%c0_3, %c0_4] : memref<1x32xf32, #tpu.memory_space<vmem>>, vector<1x32xf32>
    %4 = vector.broadcast %3 : vector<1x32xf32> to vector<4x32xf32>
    %5 = arith.addf %2, %4 : vector<4x32xf32>
    %cst_5 = arith.constant 0.000000e+00 : f32
    %6 = vector.broadcast %cst_5 : f32 to vector<4x32xf32>
    %7 = arith.maximumf %5, %6 : vector<4x32xf32>
    %c0_6 = arith.constant 0 : index
    %c0_7 = arith.constant 0 : index
    %8 = vector.load %arg4[%c0_6, %c0_7] : memref<32x10xf32, #tpu.memory_space<vmem>>, vector<32x10xf32>
    %cst_8 = arith.constant dense<0.000000e+00> : vector<4x10xf32>
    %9 = tpu.matmul %7, %8, %cst_8 {dimension_numbers = #tpu.dot_dimension_numbers<[1], [0], [0], [1], [0, 0, 1, 1], [], []>} : vector<4x32xf32>, vector<32x10xf32>, vector<4x10xf32> -> vector<4x10xf32>
    %c0_9 = arith.constant 0 : index
    %c0_10 = arith.constant 0 : index
    %10 = vector.load %arg5[%c0_9, %c0_10] : memref<1x10xf32, #tpu.memory_space<vmem>>, vector<1x10xf32>
    %11 = vector.broadcast %10 : vector<1x10xf32> to vector<4x10xf32>
    %12 = arith.addf %9, %11 : vector<4x10xf32>
    %c0_11 = arith.constant 0 : index
    %c0_12 = arith.constant 0 : index
    %13 = vector.load %arg6[%c0_11, %c0_12] : memref<4x10xf32, #tpu.memory_space<vmem>>, vector<4x10xf32>
    tpu.vector_store %arg6[%c0_11, %c0_12], %12 {strides = array<i32>} : memref<4x10xf32, #tpu.memory_space<vmem>>, vector<4x10xf32>,
    return
  }
  func.func @transform_0(%arg0: i32) -> (i32, i32) {
    %c0_i32 = arith.constant 0 : i32
    %c0_i32_0 = arith.constant 0 : i32
    return %arg0, %c0_i32 : i32, i32
  }
  func.func @transform_1(%arg0: i32) -> (i32, i32) {
    %c0_i32 = arith.constant 0 : i32
    %c0_i32_0 = arith.constant 0 : i32
    %c0_i32_1 = arith.constant 0 : i32
    return %c0_i32, %c0_i32_0 : i32, i32
  }
  func.func @transform_2(%arg0: i32) -> (i32, i32) {
    %c0_i32 = arith.constant 0 : i32
    %c0_i32_0 = arith.constant 0 : i32
    %c0_i32_1 = arith.constant 0 : i32
    return %c0_i32, %c0_i32_0 : i32, i32
  }
  func.func @transform_3(%arg0: i32) -> (i32, i32) {
    %c0_i32 = arith.constant 0 : i32
    %c0_i32_0 = arith.constant 0 : i32
    %c0_i32_1 = arith.constant 0 : i32
    return %c0_i32, %c0_i32_0 : i32, i32
  }
  func.func @transform_4(%arg0: i32) -> (i32, i32) {
    %c0_i32 = arith.constant 0 : i32
    %c0_i32_0 = arith.constant 0 : i32
    %c0_i32_1 = arith.constant 0 : i32
    return %c0_i32, %c0_i32_0 : i32, i32
  }
  func.func @transform_5(%arg0: i32) -> (i32, i32) {
    %c0_i32 = arith.constant 0 : i32
    %c0_i32_0 = arith.constant 0 : i32
    return %arg0, %c0_i32 : i32, i32
  }
}

</mosaic_0001>

<llo_original>
// kernel: _lambda_.2
$region0: #{_lambda_.2}
  #allocation0 [shape = 'u32[]', space=smem, size = 0x4, offset = 0x4, fixed_abs, tag = 'smem constant byte address 0x4 - core index']
  #allocation1 [shape = 'u32[144,128]{1,0:T(1,128)}', space=vmem, size = 0x12000, scoped, tag = 'internal scratch']
  %s0 = inlined_call_operand.vmem [shape: f32[4,256,152], index: 0, kind: input, shape index: {}]
  %s1 = inlined_call_operand.vmem [shape: f32[152,8], index: 1, kind: input, shape index: {}]
  %s2 = inlined_call_operand.vmem [shape: f32[1,8], index: 2, kind: input, shape index: {}]
  %s3 = inlined_call_operand.vmem [shape: f32[256,8], index: 3, kind: output, shape index: {}]
  %s4 = sld [smem:[#allocation0]]
  $region68: #{_lambda_.2} parent=0
    _
  %s6 = ssub.s32 1, %s4
  %s7 = scalar_select 0, %s6, %s4
  $region1: #{_lambda_.2} parent=0
    #allocation2 [shape = 'u8[1048576]{0}', space=vmem, size = 0x100000, scoped, tag = 'input window, operand 0']
    loop: start=0, step=1, limit=4
    $region2: #{_lambda_.2} parent=1 // loop_pre_header
      _
    $region3: #{_lambda_.2} parent=1 // loop_header
      %s9 = sphi 0, %s13
      %p10 = scmp.ge.s32.totalorder %s9, 4
      %s19 = sphi 0, %s21
      %s22 = sphi 0, %s19
      %s23 = sphi 0, %s22
      %s39 = sphi 0, %s23
      %s43 = sphi 0, %s43
      %s45 = sphi 0, %s43
      %s46 = sphi 0, %s45
      %s60 = sphi 0, %s46
      %s64 = sphi 0, %s64
      %s66 = sphi 0, %s64
      %s67 = sphi 0, %s66
      %s81 = sphi 0, %s67
      %s87 = sphi 0, %s89
      %s90 = sphi 0, %s87
      %s91 = sphi 0, %s90
      %s107 = sphi 0, %s91
    $region4: #{_lambda_.2} parent=1 // loop_header_branch
      %12 = sbr.rel (%p10) target = $region8
    $region5: #{_lambda_.2} parent=1 // loop_body
      %s14 = ssub.s32 %s9, 1
      %s15 = ssub.s32 %s9, 2
      %s16 = sadd.s32 %s9, 1
      %s17 = ssub.s32 %s9, %s16
      %p18 = scmp.eq.s32.totalorder %s17, 0
      %s20 = sadd.s32 %s19, 1
      %s21 = scalar_select %p18, %s19, %s20
      %p24 = pneg %p18
      %p25 = scmp.eq.s32.totalorder %s9, 1
      %p26 = por %p24, %p25
      %p27 = scmp.ne.s32.totalorder %s19, %s22
      %p28 = scmp.eq.s32.totalorder %s9, 0
      %p29 = por %p27, %p28
      %p30 = scmp.ne.s32.totalorder %s19, %s22
      %p31 = scmp.eq.s32.totalorder %s14, 1
      %p32 = por %p30, %p31
      %p33 = scmp.ne.s32.totalorder %s22, %s23
      %p34 = scmp.eq.s32.totalorder %s14, 0
      %p35 = por %p33, %p34
      %p36 = scmp.ne.s32.totalorder %s22, %s23
      %p37 = scmp.eq.s32.totalorder %s15, 1
      %p38 = por %p36, %p37
      %p40 = scmp.ne.s32.totalorder %s23, %s39
      %p41 = scmp.eq.s32.totalorder %s15, 0
      %p42 = por %p40, %p41
      %s44 = sadd.s32 %s43, 1
      %p47 = scmp.eq.s32.totalorder %s9, 1
      %p48 = scmp.ne.s32.totalorder %s43, %s45
      %p49 = scmp.eq.s32.totalorder %s9, 0
      %p50 = por %p48, %p49
      %p51 = scmp.ne.s32.totalorder %s43, %s45
      %p52 = scmp.eq.s32.totalorder %s14, 1
      %p53 = por %p51, %p52
      %p54 = scmp.ne.s32.totalorder %s45, %s46
      %p55 = scmp.eq.s32.totalorder %s14, 0
      %p56 = por %p54, %p55
      %p57 = scmp.ne.s32.totalorder %s45, %s46
      %p58 = scmp.eq.s32.totalorder %s15, 1
      %p59 = por %p57, %p58
      %p61 = scmp.ne.s32.totalorder %s46, %s60
      %p62 = scmp.eq.s32.totalorder %s15, 0
      %p63 = por %p61, %p62
      %s65 = sadd.s32 %s64, 1
      %p68 = scmp.eq.s32.totalorder %s9, 1
      %p69 = scmp.ne.s32.totalorder %s64, %s66
      %p70 = scmp.eq.s32.totalorder %s9, 0
      %p71 = por %p69, %p70
      %p72 = scmp.ne.s32.totalorder %s64, %s66
      %p73 = scmp.eq.s32.totalorder %s14, 1
      %p74 = por %p72, %p73
      %p75 = scmp.ne.s32.totalorder %s66, %s67
      %p76 = scmp.eq.s32.totalorder %s14, 0
      %p77 = por %p75, %p76
      %p78 = scmp.ne.s32.totalorder %s66, %s67
      %p79 = scmp.eq.s32.totalorder %s15, 1
      %p80 = por %p78, %p79
      %p82 = scmp.ne.s32.totalorder %s67, %s81
      %p83 = scmp.eq.s32.totalorder %s15, 0
      %p84 = por %p82, %p83
      %s85 = ssub.s32 %s9, %s16
      %p86 = scmp.eq.s32.totalorder %s85, 0
      %s88 = sadd.s32 %s87, 1
      %s89 = scalar_select %p86, %s87, %s88
      %p92 = pneg %p86
      %p93 = scmp.eq.s32.totalorder %s9, 1
      %p94 = por %p92, %p93
      %p95 = scmp.ne.s32.totalorder %s87, %s90
      %p96 = scmp.eq.s32.totalorder %s9, 0
      %p97 = por %p95, %p96
      %p98 = scmp.ne.s32.totalorder %s87, %s90
      %p99 = scmp.eq.s32.totalorder %s14, 1
      %p100 = por %p98, %p99
      %p101 = scmp.ne.s32.totalorder %s90, %s91
      %p102 = scmp.eq.s32.totalorder %s14, 0
      %p103 = por %p101, %p102
      %p104 = scmp.ne.s32.totalorder %s90, %s91
      %p105 = scmp.eq.s32.totalorder %s15, 1
      %p106 = por %p104, %p105
      %p108 = scmp.ne.s32.totalorder %s91, %s107
      %p109 = scmp.eq.s32.totalorder %s15, 0
      %p110 = por %p108, %p109
      %p111 = scmp.le.s32.totalorder 1, %s9
      %p112 = scmp.lt.s32.totalorder %s9, 3
      %p113 = pnand %p111, %p112
      %p114 = pneg %p113
      // Predicated region
      $region9: #{_lambda_.2} parent=5 // pred_check
        _
      $region10: #{_lambda_.2} parent=5 // pred_check_branch
        %116 = sbr.rel (%p113) target = $region12
      $region11: #{_lambda_.2} parent=5 // pred_region
        %s117 = ssub.s32 %s9, 1
        // Predicated region
        $region13: #{_lambda_.2} parent=11 // pred_check
          %p118 = pneg %p56
        $region14: #{_lambda_.2} parent=11 // pred_check_branch
          %120 = sbr.rel (%p118) target = $region16
        $region15: #{_lambda_.2} parent=11 // pred_region
          _
        $region16: #{_lambda_.2} parent=11 // pred_fallthru
          _
        // Predicated region
        $region17: #{_lambda_.2} parent=11 // pred_check
          %p121 = pneg %p77
        $region18: #{_lambda_.2} parent=11 // pred_check_branch
          %123 = sbr.rel (%p121) target = $region20
        $region19: #{_lambda_.2} parent=11 // pred_region
          _
        $region20: #{_lambda_.2} parent=11 // pred_fallthru
          _
      $region12: #{_lambda_.2} parent=5 // pred_fallthru
        _
      %p124 = scmp.lt.s32.totalorder %s9, 2
      // Predicated region
      $region21: #{_lambda_.2} parent=5 // pred_check
        %p125 = pneg %p124
      $region22: #{_lambda_.2} parent=5 // pred_check_branch
        %127 = sbr.rel (%p125) target = $region24
      $region23: #{_lambda_.2} parent=5 // pred_region
        // Predicated region
        $region25: #{_lambda_.2} parent=23 // pred_check
          %p128 = pneg %p29
        $region26: #{_lambda_.2} parent=23 // pred_check_branch
          %130 = sbr.rel (%p128) target = $region28
        $region27: #{_lambda_.2} parent=23 // pred_region
          %s131 = sand.u32 %s19, 1
          %s132 = sand.u32 %s19, 1
          %s133 = smul.addr %s132, 1024
          %s134 = scalar_lea.vmem [#allocation2], %s133
          %s135 = smul.u32 16, %s9
          %s136 = smul.addr %s135, 2
          %s137 = smul.addr %s136, 8
          %s138 = scalar_lea.vmem %s0, %s137
          // Predicated region
          $region29: #{_lambda_.2} parent=27 // pred_check
            _
          $region30: #{_lambda_.2} parent=27 // pred_check_branch
            %140 = sbr.rel (0) target = $region32
          $region31: #{_lambda_.2} parent=27 // pred_region
            // Predicated region
            $region33: #{_lambda_.2} parent=31 // pred_check
              _
            $region34: #{_lambda_.2} parent=31 // pred_check_branch
              %142 = sbr.rel (0) target = $region36
            $region35: #{_lambda_.2} parent=31 // pred_region
              loop: start=0, step=1, limit=1
              $region37: #{_lambda_.2} parent=35 // loop_pre_header
                _
              $region38: #{_lambda_.2} parent=35 // loop_header
                %s144 = sphi 0, %s148
                %p145 = scmp.ge.s32.totalorder %s144, 1
                %s149 = sphi %s138, %s138
                %s150 = sphi %s134, %s134
              $region39: #{_lambda_.2} parent=35 // loop_header_branch
                %147 = sbr.rel (%p145) target = $region43
              $region40: #{_lambda_.2} parent=35 // loop_body
                %v151 = vld [vmem:[%s149] sm:$0xff]
                %152 = vst [vmem:[%s150] sm:$0xff] %v151
                %v153 = vld [vmem:[%s149 + $0x8] sm:$0xff]
                %154 = vst [vmem:[%s150 + $0x8] sm:$0xff] %v153
                %v155 = vld [vmem:[%s149 + $0x10] sm:$0xff]
                %156 = vst [vmem:[%s150 + $0x10] sm:$0xff] %v155
                %v157 = vld [vmem:[%s149 + $0x18] sm:$0xff]
                %158 = vst [vmem:[%s150 + $0x18] sm:$0xff] %v157
                %v159 = vld [vmem:[%s149 + $0x20] sm:$0xff]
                %160 = vst [vmem:[%s150 + $0x20] sm:$0xff] %v159
                %v161 = vld [vmem:[%s149 + $0x28] sm:$0xff]
                %162 = vst [vmem:[%s150 + $0x28] sm:$0xff] %v161
                %v163 = vld [vmem:[%s149 + $0x30] sm:$0xff]
                %164 = vst [vmem:[%s150 + $0x30] sm:$0xff] %v163
                %v165 = vld [vmem:[%s149 + $0x38] sm:$0xff]
                %166 = vst [vmem:[%s150 + $0x38] sm:$0xff] %v165
                %v167 = vld [vmem:[%s149 + $0x40] sm:$0xff]
                %168 = vst [vmem:[%s150 + $0x40] sm:$0xff] %v167
                %v169 = vld [vmem:[%s149 + $0x48] sm:$0xff]
                %170 = vst [vmem:[%s150 + $0x48] sm:$0xff] %v169
                %v171 = vld [vmem:[%s149 + $0x50] sm:$0xff]
                %172 = vst [vmem:[%s150 + $0x50] sm:$0xff] %v171
                %v173 = vld [vmem:[%s149 + $0x58] sm:$0xff]
                %174 = vst [vmem:[%s150 + $0x58] sm:$0xff] %v173
                %v175 = vld [vmem:[%s149 + $0x60] sm:$0xff]
                %176 = vst [vmem:[%s150 + $0x60] sm:$0xff] %v175
                %v177 = vld [vmem:[%s149 + $0x68] sm:$0xff]
                %178 = vst [vmem:[%s150 + $0x68] sm:$0xff] %v177
                %v179 = vld [vmem:[%s149 + $0x70] sm:$0xff]
                %180 = vst [vmem:[%s150 + $0x70] sm:$0xff] %v179
                %v181 = vld [vmem:[%s149 + $0x78] sm:$0xff]
                %182 = vst [vmem:[%s150 + $0x78] sm:$0xff] %v181
                %v183 = vld [vmem:[%s149 + $0x80] sm:$0xff]
                %184 = vst [vmem:[%s150 + $0x80] sm:$0xff] %v183
                %v185 = vld [vmem:[%s149 + $0x88] sm:$0xff]
                %186 = vst [vmem:[%s150 + $0x88] sm:$0xff] %v185
                %v187 = vld [vmem:[%s149 + $0x90] sm:$0xff]
                %188 = vst [vmem:[%s150 + $0x90] sm:$0xff] %v187
                %v189 = vld [vmem:[%s149 + $0x98] sm:$0xff]
                %190 = vst [vmem:[%s150 + $0x98] sm:$0xff] %v189
                %v191 = vld [vmem:[%s149 + $0xa0] sm:$0xff]
                %192 = vst [vmem:[%s150 + $0xa0] sm:$0xff] %v191
                %v193 = vld [vmem:[%s149 + $0xa8] sm:$0xff]
                %194 = vst [vmem:[%s150 + $0xa8] sm:$0xff] %v193
                %v195 = vld [vmem:[%s149 + $0xb0] sm:$0xff]
                %196 = vst [vmem:[%s150 + $0xb0] sm:$0xff] %v195
                %v197 = vld [vmem:[%s149 + $0xb8] sm:$0xff]
                %198 = vst [vmem:[%s150 + $0xb8] sm:$0xff] %v197
                %v199 = vld [vmem:[%s149 + $0xc0] sm:$0xff]
                %200 = vst [vmem:[%s150 + $0xc0] sm:$0xff] %v199
                %v201 = vld [vmem:[%s149 + $0xc8] sm:$0xff]
                %202 = vst [vmem:[%s150 + $0xc8] sm:$0xff] %v201
                %v203 = vld [vmem:[%s149 + $0xd0] sm:$0xff]
                %204 = vst [vmem:[%s150 + $0xd0] sm:$0xff] %v203
                %v205 = vld [vmem:[%s149 + $0xd8] sm:$0xff]
                %206 = vst [vmem:[%s150 + $0xd8] sm:$0xff] %v205
                %v207 = vld [vmem:[%s149 + $0xe0] sm:$0xff]
                %208 = vst [vmem:[%s150 + $0xe0] sm:$0xff] %v207
                %v209 = vld [vmem:[%s149 + $0xe8] sm:$0xff]
                %210 = vst [vmem:[%s150 + $0xe8] sm:$0xff] %v209
                %v211 = vld [vmem:[%s149 + $0xf0] sm:$0xff]
                %212 = vst [vmem:[%s150 + $0xf0] sm:$0xff] %v211
                %v213 = vld [vmem:[%s149 + $0xf8] sm:$0xff]
                %214 = vst [vmem:[%s150 + $0xf8] sm:$0xff] %v213
                %v215 = vld [vmem:[%s149 + $0x200] sm:$0xff]
                %216 = vst [vmem:[%s150 + $0x100] sm:$0xff] %v215
                %v217 = vld [vmem:[%s149 + $0x208] sm:$0xff]
                %218 = vst [vmem:[%s150 + $0x108] sm:$0xff] %v217
                %v219 = vld [vmem:[%s149 + $0x210] sm:$0xff]
                %220 = vst [vmem:[%s150 + $0x110] sm:$0xff] %v219
                %v221 = vld [vmem:[%s149 + $0x218] sm:$0xff]
                %222 = vst [vmem:[%s150 + $0x118] sm:$0xff] %v221
                %v223 = vld [vmem:[%s149 + $0x220] sm:$0xff]
                %224 = vst [vmem:[%s150 + $0x120] sm:$0xff] %v223
                %v225 = vld [vmem:[%s149 + $0x228] sm:$0xff]
                %226 = vst [vmem:[%s150 + $0x128] sm:$0xff] %v225
                %v227 = vld [vmem:[%s149 + $0x230] sm:$0xff]
                %228 = vst [vmem:[%s150 + $0x130] sm:$0xff] %v227
                %v229 = vld [vmem:[%s149 + $0x238] sm:$0xff]
                %230 = vst [vmem:[%s150 + $0x138] sm:$0xff] %v229
                %v231 = vld [vmem:[%s149 + $0x240] sm:$0xff]
                %232 = vst [vmem:[%s150 + $0x140] sm:$0xff] %v231
                %v233 = vld [vmem:[%s149 + $0x248] sm:$0xff]
                %234 = vst [vmem:[%s150 + $0x148] sm:$0xff] %v233
                %v235 = vld [vmem:[%s149 + $0x250] sm:$0xff]
                %236 = vst [vmem:[%s150 + $0x150] sm:$0xff] %v235
                %v237 = vld [vmem:[%s149 + $0x258] sm:$0xff]
                %238 = vst [vmem:[%s150 + $0x158] sm:$0xff] %v237
                %v239 = vld [vmem:[%s149 + $0x260] sm:$0xff]
                %240 = vst [vmem:[%s150 + $0x160] sm:$0xff] %v239
                %v241 = vld [vmem:[%s149 + $0x268] sm:$0xff]
                %242 = vst [vmem:[%s150 + $0x168] sm:$0xff] %v241
                %v243 = vld [vmem:[%s149 + $0x270] sm:$0xff]
                %244 = vst [vmem:[%s150 + $0x170] sm:$0xff] %v243
                %v245 = vld [vmem:[%s149 + $0x278] sm:$0xff]
                %246 = vst [vmem:[%s150 + $0x178] sm:$0xff] %v245
                %v247 = vld [vmem:[%s149 + $0x280] sm:$0xff]
                %248 = vst [vmem:[%s150 + $0x180] sm:$0xff] %v247
                %v249 = vld [vmem:[%s149 + $0x288] sm:$0xff]
                %250 = vst [vmem:[%s150 + $0x188] sm:$0xff] %v249
                %v251 = vld [vmem:[%s149 + $0x290] sm:$0xff]
                %252 = vst [vmem:[%s150 + $0x190] sm:$0xff] %v251
                %v253 = vld [vmem:[%s149 + $0x298] sm:$0xff]
                %254 = vst [vmem:[%s150 + $0x198] sm:$0xff] %v253
                %v255 = vld [vmem:[%s149 + $0x2a0] sm:$0xff]
                %256 = vst [vmem:[%s150 + $0x1a0] sm:$0xff] %v255
                %v257 = vld [vmem:[%s149 + $0x2a8] sm:$0xff]
                %258 = vst [vmem:[%s150 + $0x1a8] sm:$0xff] %v257
                %v259 = vld [vmem:[%s149 + $0x2b0] sm:$0xff]
                %260 = vst [vmem:[%s150 + $0x1b0] sm:$0xff] %v259
                %v261 = vld [vmem:[%s149 + $0x2b8] sm:$0xff]
                %262 = vst [vmem:[%s150 + $0x1b8] sm:$0xff] %v261
                %v263 = vld [vmem:[%s149 + $0x2c0] sm:$0xff]
                %264 = vst [vmem:[%s150 + $0x1c0] sm:$0xff] %v263
                %v265 = vld [vmem:[%s149 + $0x2c8] sm:$0xff]
                %266 = vst [vmem:[%s150 + $0x1c8] sm:$0xff] %v265
                %v267 = vld [vmem:[%s149 + $0x2d0] sm:$0xff]
                %268 = vst [vmem:[%s150 + $0x1d0] sm:$0xff] %v267
                %v269 = vld [vmem:[%s149 + $0x2d8] sm:$0xff]
                %270 = vst [vmem:[%s150 + $0x1d8] sm:$0xff] %v269
                %v271 = vld [vmem:[%s149 + $0x2e0] sm:$0xff]
                %272 = vst [vmem:[%s150 + $0x1e0] sm:$0xff] %v271
                %v273 = vld [vmem:[%s149 + $0x2e8] sm:$0xff]
                %274 = vst [vmem:[%s150 + $0x1e8] sm:$0xff] %v273
                %v275 = vld [vmem:[%s149 + $0x2f0] sm:$0xff]
                %276 = vst [vmem:[%s150 + $0x1f0] sm:$0xff] %v275
                %v277 = vld [vmem:[%s149 + $0x2f8] sm:$0xff]
                %278 = vst [vmem:[%s150 + $0x1f8] sm:$0xff] %v277
                %v279 = vld [vmem:[%s149 + $0x400] sm:$0xff]
                %280 = vst [vmem:[%s150 + $0x200] sm:$0xff] %v279
                %v281 = vld [vmem:[%s149 + $0x408] sm:$0xff]
                %282 = vst [vmem:[%s150 + $0x208] sm:$0xff] %v281
                %v283 = vld [vmem:[%s149 + $0x410] sm:$0xff]
                %284 = vst [vmem:[%s150 + $0x210] sm:$0xff] %v283
                %v285 = vld [vmem:[%s149 + $0x418] sm:$0xff]
                %286 = vst [vmem:[%s150 + $0x218] sm:$0xff] %v285
                %v287 = vld [vmem:[%s149 + $0x420] sm:$0xff]
                %288 = vst [vmem:[%s150 + $0x220] sm:$0xff] %v287
                %v289 = vld [vmem:[%s149 + $0x428] sm:$0xff]
                %290 = vst [vmem:[%s150 + $0x228] sm:$0xff] %v289
                %v291 = vld [vmem:[%s149 + $0x430] sm:$0xff]
                %292 = vst [vmem:[%s150 + $0x230] sm:$0xff] %v291
                %v293 = vld [vmem:[%s149 + $0x438] sm:$0xff]
                %294 = vst [vmem:[%s150 + $0x238] sm:$0xff] %v293
                %v295 = vld [vmem:[%s149 + $0x440] sm:$0xff]
                %296 = vst [vmem:[%s150 + $0x240] sm:$0xff] %v295
                %v297 = vld [vmem:[%s149 + $0x448] sm:$0xff]
                %298 = vst [vmem:[%s150 + $0x248] sm:$0xff] %v297
                %v299 = vld [vmem:[%s149 + $0x450] sm:$0xff]
                %300 = vst [vmem:[%s150 + $0x250] sm:$0xff] %v299
                %v301 = vld [vmem:[%s149 + $0x458] sm:$0xff]
                %302 = vst [vmem:[%s150 + $0x258] sm:$0xff] %v301
                %v303 = vld [vmem:[%s149 + $0x460] sm:$0xff]
                %304 = vst [vmem:[%s150 + $0x260] sm:$0xff] %v303
                %v305 = vld [vmem:[%s149 + $0x468] sm:$0xff]
                %306 = vst [vmem:[%s150 + $0x268] sm:$0xff] %v305
                %v307 = vld [vmem:[%s149 + $0x470] sm:$0xff]
                %308 = vst [vmem:[%s150 + $0x270] sm:$0xff] %v307
                %v309 = vld [vmem:[%s149 + $0x478] sm:$0xff]
                %310 = vst [vmem:[%s150 + $0x278] sm:$0xff] %v309
                %v311 = vld [vmem:[%s149 + $0x480] sm:$0xff]
                %312 = vst [vmem:[%s150 + $0x280] sm:$0xff] %v311
                %v313 = vld [vmem:[%s149 + $0x488] sm:$0xff]
                %314 = vst [vmem:[%s150 + $0x288] sm:$0xff] %v313
                %v315 = vld [vmem:[%s149 + $0x490] sm:$0xff]
                %316 = vst [vmem:[%s150 + $0x290] sm:$0xff] %v315
                %v317 = vld [vmem:[%s149 + $0x498] sm:$0xff]
                %318 = vst [vmem:[%s150 + $0x298] sm:$0xff] %v317
                %v319 = vld [vmem:[%s149 + $0x4a0] sm:$0xff]
                %320 = vst [vmem:[%s150 + $0x2a0] sm:$0xff] %v319
                %v321 = vld [vmem:[%s149 + $0x4a8] sm:$0xff]
                %322 = vst [vmem:[%s150 + $0x2a8] sm:$0xff] %v321
                %v323 = vld [vmem:[%s149 + $0x4b0] sm:$0xff]
                %324 = vst [vmem:[%s150 + $0x2b0] sm:$0xff] %v323
                %v325 = vld [vmem:[%s149 + $0x4b8] sm:$0xff]
                %326 = vst [vmem:[%s150 + $0x2b8] sm:$0xff] %v325
                %v327 = vld [vmem:[%s149 + $0x4c0] sm:$0xff]
                %328 = vst [vmem:[%s150 + $0x2c0] sm:$0xff] %v327
                %v329 = vld [vmem:[%s149 + $0x4c8] sm:$0xff]
                %330 = vst [vmem:[%s150 + $0x2c8] sm:$0xff] %v329
                %v331 = vld [vmem:[%s149 + $0x4d0] sm:$0xff]
                %332 = vst [vmem:[%s150 + $0x2d0] sm:$0xff] %v331
                %v333 = vld [vmem:[%s149 + $0x4d8] sm:$0xff]
                %334 = vst [vmem:[%s150 + $0x2d8] sm:$0xff] %v333
                %v335 = vld [vmem:[%s149 + $0x4e0] sm:$0xff]
                %336 = vst [vmem:[%s150 + $0x2e0] sm:$0xff] %v335
                %v337 = vld [vmem:[%s149 + $0x4e8] sm:$0xff]
                %338 = vst [vmem:[%s150 + $0x2e8] sm:$0xff] %v337
                %v339 = vld [vmem:[%s149 + $0x4f0] sm:$0xff]
                %340 = vst [vmem:[%s150 + $0x2f0] sm:$0xff] %v339
                %v341 = vld [vmem:[%s149 + $0x4f8] sm:$0xff]
                %342 = vst [vmem:[%s150 + $0x2f8] sm:$0xff] %v341
                %v343 = vld [vmem:[%s149 + $0x600] sm:$0xff]
                %344 = vst [vmem:[%s150 + $0x300] sm:$0xff] %v343
                %v345 = vld [vmem:[%s149 + $0x608] sm:$0xff]
                %346 = vst [vmem:[%s150 + $0x308] sm:$0xff] %v345
                %v347 = vld [vmem:[%s149 + $0x610] sm:$0xff]
                %348 = vst [vmem:[%s150 + $0x310] sm:$0xff] %v347
                %v349 = vld [vmem:[%s149 + $0x618] sm:$0xff]
                %350 = vst [vmem:[%s150 + $0x318] sm:$0xff] %v349
                %v351 = vld [vmem:[%s149 + $0x620] sm:$0xff]
                %352 = vst [vmem:[%s150 + $0x320] sm:$0xff] %v351
                %v353 = vld [vmem:[%s149 + $0x628] sm:$0xff]
                %354 = vst [vmem:[%s150 + $0x328] sm:$0xff] %v353
                %v355 = vld [vmem:[%s149 + $0x630] sm:$0xff]
                %356 = vst [vmem:[%s150 + $0x330] sm:$0xff] %v355
                %v357 = vld [vmem:[%s149 + $0x638] sm:$0xff]
                %358 = vst [vmem:[%s150 + $0x338] sm:$0xff] %v357
                %v359 = vld [vmem:[%s149 + $0x640] sm:$0xff]
                %360 = vst [vmem:[%s150 + $0x340] sm:$0xff] %v359
                %v361 = vld [vmem:[%s149 + $0x648] sm:$0xff]
                %362 = vst [vmem:[%s150 + $0x348] sm:$0xff] %v361
                %v363 = vld [vmem:[%s149 + $0x650] sm:$0xff]
                %364 = vst [vmem:[%s150 + $0x350] sm:$0xff] %v363
                %v365 = vld [vmem:[%s149 + $0x658] sm:$0xff]
                %366 = vst [vmem:[%s150 + $0x358] sm:$0xff] %v365
                %v367 = vld [vmem:[%s149 + $0x660] sm:$0xff]
                %368 = vst [vmem:[%s150 + $0x360] sm:$0xff] %v367
                %v369 = vld [vmem:[%s149 + $0x668] sm:$0xff]
                %370 = vst [vmem:[%s150 + $0x368] sm:$0xff] %v369
                %v371 = vld [vmem:[%s149 + $0x670] sm:$0xff]
                %372 = vst [vmem:[%s150 + $0x370] sm:$0xff] %v371
                %v373 = vld [vmem:[%s149 + $0x678] sm:$0xff]
                %374 = vst [vmem:[%s150 + $0x378] sm:$0xff] %v373
                %v375 = vld [vmem:[%s149 + $0x680] sm:$0xff]
                %376 = vst [vmem:[%s150 + $0x380] sm:$0xff] %v375
                %v377 = vld [vmem:[%s149 + $0x688] sm:$0xff]
                %378 = vst [vmem:[%s150 + $0x388] sm:$0xff] %v377
                %v379 = vld [vmem:[%s149 + $0x690] sm:$0xff]
                %380 = vst [vmem:[%s150 + $0x390] sm:$0xff] %v379
                %v381 = vld [vmem:[%s149 + $0x698] sm:$0xff]
                %382 = vst [vmem:[%s150 + $0x398] sm:$0xff] %v381
                %v383 = vld [vmem:[%s149 + $0x6a0] sm:$0xff]
                %384 = vst [vmem:[%s150 + $0x3a0] sm:$0xff] %v383
                %v385 = vld [vmem:[%s149 + $0x6a8] sm:$0xff]
                %386 = vst [vmem:[%s150 + $0x3a8] sm:$0xff] %v385
                %v387 = vld [vmem:[%s149 + $0x6b0] sm:$0xff]
                %388 = vst [vmem:[%s150 + $0x3b0] sm:$0xff] %v387
                %v389 = vld [vmem:[%s149 + $0x6b8] sm:$0xff]
                %390 = vst [vmem:[%s150 + $0x3b8] sm:$0xff] %v389
                %v391 = vld [vmem:[%s149 + $0x6c0] sm:$0xff]
                %392 = vst [vmem:[%s150 + $0x3c0] sm:$0xff] %v391
                %v393 = vld [vmem:[%s149 + $0x6c8] sm:$0xff]
                %394 = vst [vmem:[%s150 + $0x3c8] sm:$0xff] %v393
                %v395 = vld [vmem:[%s149 + $0x6d0] sm:$0xff]
                %396 = vst [vmem:[%s150 + $0x3d0] sm:$0xff] %v395
                %v397 = vld [vmem:[%s149 + $0x6d8] sm:$0xff]
                %398 = vst [vmem:[%s150 + $0x3d8] sm:$0xff] %v397
                %v399 = vld [vmem:[%s149 + $0x6e0] sm:$0xff]
                %400 = vst [vmem:[%s150 + $0x3e0] sm:$0xff] %v399
                %v401 = vld [vmem:[%s149 + $0x6e8] sm:$0xff]
                %402 = vst [vmem:[%s150 + $0x3e8] sm:$0xff] %v401
                %v403 = vld [vmem:[%s149 + $0x6f0] sm:$0xff]
                %404 = vst [vmem:[%s150 + $0x3f0] sm:$0xff] %v403
                %v405 = vld [vmem:[%s149 + $0x6f8] sm:$0xff]
                %406 = vst [vmem:[%s150 + $0x3f8] sm:$0xff] %v405
              $region41: #{_lambda_.2} parent=35 // loop_footer
                %s148 = sadd.s32 1, %s144
              $region42: #{_lambda_.2} parent=35 // loop_footer_branch
                %143 = sbr.rel target = $region38
              $region43: #{_lambda_.2} parent=35 // loop_exit
                _
            $region36: #{_lambda_.2} parent=31 // pred_fallthru
              _
            // Predicated region
            $region44: #{_lambda_.2} parent=31 // pred_check
              _
            $region45: #{_lambda_.2} parent=31 // pred_check_branch
              %408 = sbr.rel target = $region47
            $region46: #{_lambda_.2} parent=31 // pred_region
              _
            $region47: #{_lambda_.2} parent=31 // pred_fallthru
              _
          $region32: #{_lambda_.2} parent=27 // pred_fallthru
            _
          %409 = vnop
        $region28: #{_lambda_.2} parent=23 // pred_fallthru
          _
      $region24: #{_lambda_.2} parent=5 // pred_fallthru
        _
      %p410 = scmp.le.s32.totalorder 1, %s9
      %p411 = scmp.lt.s32.totalorder %s9, 3
      %p412 = pnand %p410, %p411
      %p413 = pneg %p412
      // Predicated region
      $region48: #{_lambda_.2} parent=5 // pred_check
        _
      $region49: #{_lambda_.2} parent=5 // pred_check_branch
        %415 = sbr.rel (%p412) target = $region51
      $region50: #{_lambda_.2} parent=5 // pred_region
        %s416 = ssub.s32 %s9, 1
        %s417 = sand.u32 %s22, 1
        %s418 = sand.u32 %s22, 1
        %s419 = smul.addr %s418, 1024
        %s420 = scalar_lea.vmem [#allocation2], %s419
        // Predicated region
        $region52: #{_lambda_.2} parent=50 // pred_check
          %p421 = pneg %p35
        $region53: #{_lambda_.2} parent=50 // pred_check_branch
          %423 = sbr.rel (%p421) target = $region55
        $region54: #{_lambda_.2} parent=50 // pred_region
          _
        $region55: #{_lambda_.2} parent=50 // pred_fallthru
          _
        %s424 = sand.u32 %s22, 1
        %s425 = sand.u32 %s22, 1
        %s426 = smul.addr %s425, 1024
        %s427 = scalar_lea.vmem [#allocation2], %s426
        %p428 = pneg %p35
        %p429 = pneg %p32
        %p430 = pneg %p56
        %p431 = pneg %p53
        %p432 = pneg %p77
        %p433 = pneg %p74
        %p434 = pneg %p103
        %p435 = pneg %p100
        %s436 = smul.u32 16, %s14
        %p437 = scmp.lt.s32.totalorder %s436, 31
        %s438 = scalar_select %p437, %s436, 31
        %s439 = smul.addr %s438, 8
        %s440 = scalar_lea.vmem %s3, %s439
        %s441 = smul.u32 16, %s14
        %s442 = smul.u32 16, %s14
        %p443 = scmp.lt.s32.totalorder %s442, 31
        %s444 = scalar_select %p443, %s442, 31
        %s445 = smul.addr %s444, 8
        %s446 = scalar_lea.vmem %s3, %s445
        %s447 = smul.u32 16, %s14
        %v448 = vld [vmem:[%s1] sm:$0xff]
        %v449 = vld [vmem:[%s1 + $0x8] sm:$0xff]
        %v450 = vld [vmem:[%s1 + $0x10] sm:$0xff]
        %v451 = vld [vmem:[%s1 + $0x18] sm:$0xff]
        %v452 = vld [vmem:[%s1 + $0x20] sm:$0xff]
        %v453 = vld [vmem:[%s1 + $0x28] sm:$0xff]
        %v454 = vld [vmem:[%s1 + $0x30] sm:$0xff]
        %v455 = vld [vmem:[%s1 + $0x38] sm:$0xff]
        %v456 = vld [vmem:[%s1 + $0x40] sm:$0xff]
        %v457 = vld [vmem:[%s1 + $0x48] sm:$0xff]
        %v458 = vld [vmem:[%s1 + $0x50] sm:$0xff]
        %v459 = vld [vmem:[%s1 + $0x58] sm:$0xff]
        %v460 = vld [vmem:[%s1 + $0x60] sm:$0xff]
        %v461 = vld [vmem:[%s1 + $0x68] sm:$0xff]
        %v462 = vld [vmem:[%s1 + $0x70] sm:$0xff]
        %v463 = vld [vmem:[%s1 + $0x78] sm:$0xff]
        %v464 = vld [vmem:[%s1 + $0x80] sm:$0xff]
        %v465 = vld [vmem:[%s1 + $0x88] sm:$0xff]
        %v466 = vld [vmem:[%s1 + $0x90] sm:$0xff]
        %v467 = vld [vmem:[%s420] sm:$0xff]
        %v468 = vld [vmem:[%s420 + $0x8] sm:$0xff]
        %v469 = vld [vmem:[%s420 + $0x10] sm:$0xff]
        %v470 = vld [vmem:[%s420 + $0x18] sm:$0xff]
        %v471 = vld [vmem:[%s420 + $0x20] sm:$0xff]
        %v472 = vld [vmem:[%s420 + $0x28] sm:$0xff]
        %v473 = vld [vmem:[%s420 + $0x30] sm:$0xff]
        %v474 = vld [vmem:[%s420 + $0x38] sm:$0xff]
        %v475 = vld [vmem:[%s420 + $0x40] sm:$0xff]
        %v476 = vld [vmem:[%s420 + $0x48] sm:$0xff]
        %v477 = vld [vmem:[%s420 + $0x50] sm:$0xff]
        %v478 = vld [vmem:[%s420 + $0x58] sm:$0xff]
        %v479 = vld [vmem:[%s420 + $0x60] sm:$0xff]
        %v480 = vld [vmem:[%s420 + $0x68] sm:$0xff]
        %v481 = vld [vmem:[%s420 + $0x70] sm:$0xff]
        %v482 = vld [vmem:[%s420 + $0x78] sm:$0xff]
        %v483 = vld [vmem:[%s420 + $0x80] sm:$0xff]
        %v484 = vld [vmem:[%s420 + $0x88] sm:$0xff]
        %v485 = vld [vmem:[%s420 + $0x90] sm:$0xff]
        %v486 = vld [vmem:[%s420 + $0x98] sm:$0xff]
        %v487 = vld [vmem:[%s420 + $0xa0] sm:$0xff]
        %v488 = vld [vmem:[%s420 + $0xa8] sm:$0xff]
        %v489 = vld [vmem:[%s420 + $0xb0] sm:$0xff]
        %v490 = vld [vmem:[%s420 + $0xb8] sm:$0xff]
        %v491 = vld [vmem:[%s420 + $0xc0] sm:$0xff]
        %v492 = vld [vmem:[%s420 + $0xc8] sm:$0xff]
        %v493 = vld [vmem:[%s420 + $0xd0] sm:$0xff]
        %v494 = vld [vmem:[%s420 + $0xd8] sm:$0xff]
        %v495 = vld [vmem:[%s420 + $0xe0] sm:$0xff]
        %v496 = vld [vmem:[%s420 + $0xe8] sm:$0xff]
        %v497 = vld [vmem:[%s420 + $0xf0] sm:$0xff]
        %v498 = vld [vmem:[%s420 + $0xf8] sm:$0xff]
        %vm499 = vcmask 195584
        %v501 = vsel %vm499, %v468, 0
        %v504 = vsel %vm499, %v470, 0
        %v507 = vsel %vm499, %v472, 0
        %v510 = vsel %vm499, %v474, 0
        %v513 = vsel %vm499, %v476, 0
        %v516 = vsel %vm499, %v478, 0
        %v519 = vsel %vm499, %v480, 0
        %v522 = vsel %vm499, %v482, 0
        %v525 = vsel %vm499, %v484, 0
        %v528 = vsel %vm499, %v486, 0
        %v531 = vsel %vm499, %v488, 0
        %v534 = vsel %vm499, %v490, 0
        %v537 = vsel %vm499, %v492, 0
        %v540 = vsel %vm499, %v494, 0
        %v543 = vsel %vm499, %v496, 0
        %v546 = vsel %vm499, %v498, 0
        %548 = vmatprep.subr.mxu0 0.0
        %549 = vmatpush1.msra.mxu0 %v448
        %550 = vmatprep.subr.mxu0 0.0
        %551 = vmatpush1.msra.mxu0 %v449
        %552 = vmatprep.subr.mxu0 0.0
        %553 = vmatpush1.msra.mxu0 %v450
        %554 = vmatprep.subr.mxu0 0.0
        %555 = vmatpush1.msra.mxu0 %v451
        %556 = vmatprep.subr.mxu0 0.0
        %557 = vmatpush1.msra.mxu0 %v452
        %558 = vmatprep.subr.mxu0 0.0
        %559 = vmatpush1.msra.mxu0 %v453
        %560 = vmatprep.subr.mxu0 0.0
        %561 = vmatpush1.msra.mxu0 %v454
        %562 = vmatprep.subr.mxu0 0.0
        %563 = vmatpush1.msra.mxu0 %v455
        %564 = vmatprep.subr.mxu0 0.0
        %565 = vmatpush1.msra.mxu0 %v456
        %566 = vmatprep.subr.mxu0 0.0
        %567 = vmatpush1.msra.mxu0 %v457
        %568 = vmatprep.subr.mxu0 0.0
        %569 = vmatpush1.msra.mxu0 %v458
        %570 = vmatprep.subr.mxu0 0.0
        %571 = vmatpush1.msra.mxu0 %v459
        %572 = vmatprep.subr.mxu0 0.0
        %573 = vmatpush1.msra.mxu0 %v460
        %574 = vmatprep.subr.mxu0 0.0
        %575 = vmatpush1.msra.mxu0 %v461
        %576 = vmatprep.subr.mxu0 0.0
        %577 = vmatpush1.msra.mxu0 %v462
        %578 = vmatprep.subr.mxu0 0.0
        %579 = vmatpush1.msra.mxu0 %v463
        %580 = vmatprep.subr.mxu0 0.0
        %581 = vmatpush1.msra.mxu0 %v464
        %582 = vmatprep.subr.mxu0 0.0
        %583 = vmatpush1.msra.mxu0 %v465
        %584 = vmatprep.subr.mxu0 0.0
        %585 = vmatpush1.msra.mxu0 %v466
        %586 = vmatprep.subr.mxu0 0.0
        %587 = vmatpush1.msra.mxu0 0.0
        %588 = vmatprep.subr.mxu0 0.0
        %589 = vmatpush1.msra.mxu0 0.0
        %590 = vmatprep.subr.mxu0 0.0
        %591 = vmatpush1.msra.mxu0 0.0
        %592 = vmatprep.subr.mxu0 0.0
        %593 = vmatpush1.msra.mxu0 0.0
        %594 = vmatprep.subr.mxu0 0.0
        %595 = vmatpush1.msra.mxu0 0.0
        %596 = vmatprep.subr.mxu0 0.0
        %597 = vmatpush1.msra.mxu0 0.0
        %598 = vmatprep.subr.mxu0 0.0
        %599 = vmatpush1.msra.mxu0 0.0
        %600 = vmatprep.subr.mxu0 0.0
        %601 = vmatpush1.msra.mxu0 0.0
        %602 = vmatprep.subr.mxu0 0.0
        %603 = vmatpush1.msra.mxu0 0.0
        %604 = vmatprep.subr.mxu0 0.0
        %605 = vmatpush1.msra.mxu0 0.0
        %606 = vmatprep.subr.mxu0 0.0
        %607 = vmatpush1.msra.mxu0 0.0
        %608 = vmatprep.subr.mxu0 0.0
        %609 = vmatpush1.msra.mxu0 0.0
        %610 = vmatprep.subr.mxu0 0.0
        %611 = vmatpush1.msra.mxu0 0.0
        %612 = vmatprep.mubr.f32.mxu0 %v501
        %613 = vmatmul.mubr.f32.gmra.mrb[0].mxu0 %v467
        %v614 = vpop.f32.mrb[0].mxu0
        %v615 = vadd.f32 0.0, %v614
        %v616 = vpop.f32.mrb[0].mxu0
        %617 = vmatprep.mubr.f32.mxu0 %v504
        %618 = vmatmul.mubr.f32.gmra.mrb[0].mxu0 %v469
        %v619 = vpop.f32.mrb[0].mxu0
        %v620 = vadd.f32 0.0, %v619
        %v621 = vpop.f32.mrb[0].mxu0
        %622 = vmatprep.mubr.f32.mxu0 %v507
        %623 = vmatmul.mubr.f32.gmra.mrb[0].mxu0 %v471
        %v624 = vpop.f32.mrb[0].mxu0
        %v625 = vadd.f32 0.0, %v624
        %v626 = vpop.f32.mrb[0].mxu0
        %627 = vmatprep.mubr.f32.mxu0 %v510
        %628 = vmatmul.mubr.f32.gmra.mrb[0].mxu0 %v473
        %v629 = vpop.f32.mrb[0].mxu0
        %v630 = vadd.f32 0.0, %v629
        %v631 = vpop.f32.mrb[0].mxu0
        %632 = vmatprep.mubr.f32.mxu0 %v513
        %633 = vmatmul.mubr.f32.gmra.mrb[0].mxu0 %v475
        %v634 = vpop.f32.mrb[0].mxu0
        %v635 = vadd.f32 0.0, %v634
        %v636 = vpop.f32.mrb[0].mxu0
        %637 = vmatprep.mubr.f32.mxu0 %v516
        %638 = vmatmul.mubr.f32.gmra.mrb[0].mxu0 %v477
        %v639 = vpop.f32.mrb[0].mxu0
        %v640 = vadd.f32 0.0, %v639
        %v641 = vpop.f32.mrb[0].mxu0
        %642 = vmatprep.mubr.f32.mxu0 %v519
        %643 = vmatmul.mubr.f32.gmra.mrb[0].mxu0 %v479
        %v644 = vpop.f32.mrb[0].mxu0
        %v645 = vadd.f32 0.0, %v644
        %v646 = vpop.f32.mrb[0].mxu0
        %647 = vmatprep.mubr.f32.mxu0 %v522
        %648 = vmatmul.mubr.f32.gmra.mrb[0].mxu0 %v481
        %v649 = vpop.f32.mrb[0].mxu0
        %v650 = vadd.f32 0.0, %v649
        %v651 = vpop.f32.mrb[0].mxu0
        %652 = vmatprep.mubr.f32.mxu0 %v525
        %653 = vmatmul.mubr.f32.gmra.mrb[0].mxu0 %v483
        %v654 = vpop.f32.mrb[0].mxu0
        %v655 = vadd.f32 0.0, %v654
        %v656 = vpop.f32.mrb[0].mxu0
        %657 = vmatprep.mubr.f32.mxu0 %v528
        %658 = vmatmul.mubr.f32.gmra.mrb[0].mxu0 %v485
        %v659 = vpop.f32.mrb[0].mxu0
        %v660 = vadd.f32 0.0, %v659
        %v661 = vpop.f32.mrb[0].mxu0
        %662 = vmatprep.mubr.f32.mxu0 %v531
        %663 = vmatmul.mubr.f32.gmra.mrb[0].mxu0 %v487
        %v664 = vpop.f32.mrb[0].mxu0
        %v665 = vadd.f32 0.0, %v664
        %v666 = vpop.f32.mrb[0].mxu0
        %667 = vmatprep.mubr.f32.mxu0 %v534
        %668 = vmatmul.mubr.f32.gmra.mrb[0].mxu0 %v489
        %v669 = vpop.f32.mrb[0].mxu0
        %v670 = vadd.f32 0.0, %v669
        %v671 = vpop.f32.mrb[0].mxu0
        %672 = vmatprep.mubr.f32.mxu0 %v537
        %673 = vmatmul.mubr.f32.gmra.mrb[0].mxu0 %v491
        %v674 = vpop.f32.mrb[0].mxu0
        %v675 = vadd.f32 0.0, %v674
        %v676 = vpop.f32.mrb[0].mxu0
        %677 = vmatprep.mubr.f32.mxu0 %v540
        %678 = vmatmul.mubr.f32.gmra.mrb[0].mxu0 %v493
        %v679 = vpop.f32.mrb[0].mxu0
        %v680 = vadd.f32 0.0, %v679
        %v681 = vpop.f32.mrb[0].mxu0
        %682 = vmatprep.mubr.f32.mxu0 %v543
        %683 = vmatmul.mubr.f32.gmra.mrb[0].mxu0 %v495
        %v684 = vpop.f32.mrb[0].mxu0
        %v685 = vadd.f32 0.0, %v684
        %v686 = vpop.f32.mrb[0].mxu0
        %687 = vmatprep.mubr.f32.mxu0 %v546
        %688 = vmatmul.mubr.f32.gmra.mrb[0].mxu0 %v497
        %v689 = vpop.f32.mrb[0].mxu0
        %v690 = vadd.f32 0.0, %v689
        %v691 = vpop.f32.mrb[0].mxu0
        %692 = vdwg.mxu0
        %s693 = scalar_lea.vmem %s420, 256 [#allocation2]
        %v694 = vld [vmem:[%s693] sm:$0xff]
        %v695 = vld [vmem:[%s693 + $0x8] sm:$0xff]
        %v696 = vld [vmem:[%s693 + $0x10] sm:$0xff]
        %v697 = vld [vmem:[%s693 + $0x18] sm:$0xff]
        %v698 = vld [vmem:[%s693 + $0x20] sm:$0xff]
        %v699 = vld [vmem:[%s693 + $0x28] sm:$0xff]
        %v700 = vld [vmem:[%s693 + $0x30] sm:$0xff]
        %v701 = vld [vmem:[%s693 + $0x38] sm:$0xff]
        %v702 = vld [vmem:[%s693 + $0x40] sm:$0xff]
        %v703 = vld [vmem:[%s693 + $0x48] sm:$0xff]
        %v704 = vld [vmem:[%s693 + $0x50] sm:$0xff]
        %v705 = vld [vmem:[%s693 + $0x58] sm:$0xff]
        %v706 = vld [vmem:[%s693 + $0x60] sm:$0xff]
        %v707 = vld [vmem:[%s693 + $0x68] sm:$0xff]
        %v708 = vld [vmem:[%s693 + $0x70] sm:$0xff]
        %v709 = vld [vmem:[%s693 + $0x78] sm:$0xff]
        %v710 = vld [vmem:[%s693 + $0x80] sm:$0xff]
        %v711 = vld [vmem:[%s693 + $0x88] sm:$0xff]
        %v712 = vld [vmem:[%s693 + $0x90] sm:$0xff]
        %v713 = vld [vmem:[%s693 + $0x98] sm:$0xff]
        %v714 = vld [vmem:[%s693 + $0xa0] sm:$0xff]
        %v715 = vld [vmem:[%s693 + $0xa8] sm:$0xff]
        %v716 = vld [vmem:[%s693 + $0xb0] sm:$0xff]
        %v717 = vld [vmem:[%s693 + $0xb8] sm:$0xff]
        %v718 = vld [vmem:[%s693 + $0xc0] sm:$0xff]
        %v719 = vld [vmem:[%s693 + $0xc8] sm:$0xff]
        %v720 = vld [vmem:[%s693 + $0xd0] sm:$0xff]
        %v721 = vld [vmem:[%s693 + $0xd8] sm:$0xff]
        %v722 = vld [vmem:[%s693 + $0xe0] sm:$0xff]
        %v723 = vld [vmem:[%s693 + $0xe8] sm:$0xff]
        %v724 = vld [vmem:[%s693 + $0xf0] sm:$0xff]
        %v725 = vld [vmem:[%s693 + $0xf8] sm:$0xff]
        %v727 = vsel %vm499, %v695, 0
        %v730 = vsel %vm499, %v697, 0
        %v733 = vsel %vm499, %v699, 0
        %v736 = vsel %vm499, %v701, 0
        %v739 = vsel %vm499, %v703, 0
        %v742 = vsel %vm499, %v705, 0
        %v745 = vsel %vm499, %v707, 0
        %v748 = vsel %vm499, %v709, 0
        %v751 = vsel %vm499, %v711, 0
        %v754 = vsel %vm499, %v713, 0
        %v757 = vsel %vm499, %v715, 0
        %v760 = vsel %vm499, %v717, 0
        %v763 = vsel %vm499, %v719, 0
        %v766 = vsel %vm499, %v721, 0
        %v769 = vsel %vm499, %v723, 0
        %v772 = vsel %vm499, %v725, 0
        %774 = vmatprep.subr.mxu0 0.0
        %775 = vmatpush1.msra.mxu0 %v448
        %776 = vmatprep.subr.mxu0 0.0
        %777 = vmatpush1.msra.mxu0 %v449
        %778 = vmatprep.subr.mxu0 0.0
        %779 = vmatpush1.msra.mxu0 %v450
        %780 = vmatprep.subr.mxu0 0.0
        %781 = vmatpush1.msra.mxu0 %v451
        %782 = vmatprep.subr.mxu0 0.0
        %783 = vmatpush1.msra.mxu0 %v452
        %784 = vmatprep.subr.mxu0 0.0
        %785 = vmatpush1.msra.mxu0 %v453
        %786 = vmatprep.subr.mxu0 0.0
        %787 = vmatpush1.msra.mxu0 %v454
        %788 = vmatprep.subr.mxu0 0.0
        %789 = vmatpush1.msra.mxu0 %v455
        %790 = vmatprep.subr.mxu0 0.0
        %791 = vmatpush1.msra.mxu0 %v456
        %792 = vmatprep.subr.mxu0 0.0
        %793 = vmatpush1.msra.mxu0 %v457
        %794 = vmatprep.subr.mxu0 0.0
        %795 = vmatpush1.msra.mxu0 %v458
        %796 = vmatprep.subr.mxu0 0.0
        %797 = vmatpush1.msra.mxu0 %v459
        %798 = vmatprep.subr.mxu0 0.0
        %799 = vmatpush1.msra.mxu0 %v460
        %800 = vmatprep.subr.mxu0 0.0
        %801 = vmatpush1.msra.mxu0 %v461
        %802 = vmatprep.subr.mxu0 0.0
        %803 = vmatpush1.msra.mxu0 %v462
        %804 = vmatprep.subr.mxu0 0.0
        %805 = vmatpush1.msra.mxu0 %v463
        %806 = vmatprep.subr.mxu0 0.0
        %807 = vmatpush1.msra.mxu0 %v464
        %808 = vmatprep.subr.mxu0 0.0
        %809 = vmatpush1.msra.mxu0 %v465
        %810 = vmatprep.subr.mxu0 0.0
        %811 = vmatpush1.msra.mxu0 %v466
        %812 = vmatprep.subr.mxu0 0.0
        %813 = vmatpush1.msra.mxu0 0.0
        %814 = vmatprep.subr.mxu0 0.0
        %815 = vmatpush1.msra.mxu0 0.0
        %816 = vmatprep.subr.mxu0 0.0
        %817 = vmatpush1.msra.mxu0 0.0
        %818 = vmatprep.subr.mxu0 0.0
        %819 = vmatpush1.msra.mxu0 0.0
        %820 = vmatprep.subr.mxu0 0.0
        %821 = vmatpush1.msra.mxu0 0.0
        %822 = vmatprep.subr.mxu0 0.0
        %823 = vmatpush1.msra.mxu0 0.0
        %824 = vmatprep.subr.mxu0 0.0
        %825 = vmatpush1.msra.mxu0 0.0
        %826 = vmatprep.subr.mxu0 0.0
        %827 = vmatpush1.msra.mxu0 0.0
        %828 = vmatprep.subr.mxu0 0.0
        %829 = vmatpush1.msra.mxu0 0.0
        %830 = vmatprep.subr.mxu0 0.0
        %831 = vmatpush1.msra.mxu0 0.0
        %832 = vmatprep.subr.mxu0 0.0
        %833 = vmatpush1.msra.mxu0 0.0
        %834 = vmatprep.subr.mxu0 0.0
        %835 = vmatpush1.msra.mxu0 0.0
        %836 = vmatprep.subr.mxu0 0.0
        %837 = vmatpush1.msra.mxu0 0.0
        %838 = vmatprep.mubr.f32.mxu0 %v727
        %839 = vmatmul.mubr.f32.gmra.mrb[0].mxu0 %v694
        %v840 = vpop.f32.mrb[0].mxu0
        %v841 = vadd.f32 0.0, %v840
        %v842 = vpop.f32.mrb[0].mxu0
        %843 = vmatprep.mubr.f32.mxu0 %v730
        %844 = vmatmul.mubr.f32.gmra.mrb[0].mxu0 %v696
        %v845 = vpop.f32.mrb[0].mxu0
        %v846 = vadd.f32 0.0, %v845
        %v847 = vpop.f32.mrb[0].mxu0
        %848 = vmatprep.mubr.f32.mxu0 %v733
        %849 = vmatmul.mubr.f32.gmra.mrb[0].mxu0 %v698
        %v850 = vpop.f32.mrb[0].mxu0
        %v851 = vadd.f32 0.0, %v850
        %v852 = vpop.f32.mrb[0].mxu0
        %853 = vmatprep.mubr.f32.mxu0 %v736
        %854 = vmatmul.mubr.f32.gmra.mrb[0].mxu0 %v700
        %v855 = vpop.f32.mrb[0].mxu0
        %v856 = vadd.f32 0.0, %v855
        %v857 = vpop.f32.mrb[0].mxu0
        %858 = vmatprep.mubr.f32.mxu0 %v739
        %859 = vmatmul.mubr.f32.gmra.mrb[0].mxu0 %v702
        %v860 = vpop.f32.mrb[0].mxu0
        %v861 = vadd.f32 0.0, %v860
        %v862 = vpop.f32.mrb[0].mxu0
        %863 = vmatprep.mubr.f32.mxu0 %v742
        %864 = vmatmul.mubr.f32.gmra.mrb[0].mxu0 %v704
        %v865 = vpop.f32.mrb[0].mxu0
        %v866 = vadd.f32 0.0, %v865
        %v867 = vpop.f32.mrb[0].mxu0
        %868 = vmatprep.mubr.f32.mxu0 %v745
        %869 = vmatmul.mubr.f32.gmra.mrb[0].mxu0 %v706
        %v870 = vpop.f32.mrb[0].mxu0
        %v871 = vadd.f32 0.0, %v870
        %v872 = vpop.f32.mrb[0].mxu0
        %873 = vmatprep.mubr.f32.mxu0 %v748
        %874 = vmatmul.mubr.f32.gmra.mrb[0].mxu0 %v708
        %v875 = vpop.f32.mrb[0].mxu0
        %v876 = vadd.f32 0.0, %v875
        %v877 = vpop.f32.mrb[0].mxu0
        %878 = vmatprep.mubr.f32.mxu0 %v751
        %879 = vmatmul.mubr.f32.gmra.mrb[0].mxu0 %v710
        %v880 = vpop.f32.mrb[0].mxu0
        %v881 = vadd.f32 0.0, %v880
        %v882 = vpop.f32.mrb[0].mxu0
        %883 = vmatprep.mubr.f32.mxu0 %v754
        %884 = vmatmul.mubr.f32.gmra.mrb[0].mxu0 %v712
        %v885 = vpop.f32.mrb[0].mxu0
        %v886 = vadd.f32 0.0, %v885
        %v887 = vpop.f32.mrb[0].mxu0
        %888 = vmatprep.mubr.f32.mxu0 %v757
        %889 = vmatmul.mubr.f32.gmra.mrb[0].mxu0 %v714
        %v890 = vpop.f32.mrb[0].mxu0
        %v891 = vadd.f32 0.0, %v890
        %v892 = vpop.f32.mrb[0].mxu0
        %893 = vmatprep.mubr.f32.mxu0 %v760
        %894 = vmatmul.mubr.f32.gmra.mrb[0].mxu0 %v716
        %v895 = vpop.f32.mrb[0].mxu0
        %v896 = vadd.f32 0.0, %v895
        %v897 = vpop.f32.mrb[0].mxu0
        %898 = vmatprep.mubr.f32.mxu0 %v763
        %899 = vmatmul.mubr.f32.gmra.mrb[0].mxu0 %v718
        %v900 = vpop.f32.mrb[0].mxu0
        %v901 = vadd.f32 0.0, %v900
        %v902 = vpop.f32.mrb[0].mxu0
        %903 = vmatprep.mubr.f32.mxu0 %v766
        %904 = vmatmul.mubr.f32.gmra.mrb[0].mxu0 %v720
        %v905 = vpop.f32.mrb[0].mxu0
        %v906 = vadd.f32 0.0, %v905
        %v907 = vpop.f32.mrb[0].mxu0
        %908 = vmatprep.mubr.f32.mxu0 %v769
        %909 = vmatmul.mubr.f32.gmra.mrb[0].mxu0 %v722
        %v910 = vpop.f32.mrb[0].mxu0
        %v911 = vadd.f32 0.0, %v910
        %v912 = vpop.f32.mrb[0].mxu0
        %913 = vmatprep.mubr.f32.mxu0 %v772
        %914 = vmatmul.mubr.f32.gmra.mrb[0].mxu0 %v724
        %v915 = vpop.f32.mrb[0].mxu0
        %v916 = vadd.f32 0.0, %v915
        %v917 = vpop.f32.mrb[0].mxu0
        %918 = vdwg.mxu0
        %v919 = vmax.f32 %v615, %v841
        %v920 = vmax.f32 %v620, %v846
        %v921 = vmax.f32 %v625, %v851
        %v922 = vmax.f32 %v630, %v856
        %v923 = vmax.f32 %v635, %v861
        %v924 = vmax.f32 %v640, %v866
        %v925 = vmax.f32 %v645, %v871
        %v926 = vmax.f32 %v650, %v876
        %v927 = vmax.f32 %v655, %v881
        %v928 = vmax.f32 %v660, %v886
        %v929 = vmax.f32 %v665, %v891
        %v930 = vmax.f32 %v670, %v896
        %v931 = vmax.f32 %v675, %v901
        %v932 = vmax.f32 %v680, %v906
        %v933 = vmax.f32 %v685, %v911
        %v934 = vmax.f32 %v690, %v916
        %s935 = scalar_lea.vmem %s420, 512 [#allocation2]
        %v936 = vld [vmem:[%s935] sm:$0xff]
        %v937 = vld [vmem:[%s935 + $0x8] sm:$0xff]
        %v938 = vld [vmem:[%s935 + $0x10] sm:$0xff]
        %v939 = vld [vmem:[%s935 + $0x18] sm:$0xff]
        %v940 = vld [vmem:[%s935 + $0x20] sm:$0xff]
        %v941 = vld [vmem:[%s935 + $0x28] sm:$0xff]
        %v942 = vld [vmem:[%s935 + $0x30] sm:$0xff]
        %v943 = vld [vmem:[%s935 + $0x38] sm:$0xff]
        %v944 = vld [vmem:[%s935 + $0x40] sm:$0xff]
        %v945 = vld [vmem:[%s935 + $0x48] sm:$0xff]
        %v946 = vld [vmem:[%s935 + $0x50] sm:$0xff]
        %v947 = vld [vmem:[%s935 + $0x58] sm:$0xff]
        %v948 = vld [vmem:[%s935 + $0x60] sm:$0xff]
        %v949 = vld [vmem:[%s935 + $0x68] sm:$0xff]
        %v950 = vld [vmem:[%s935 + $0x70] sm:$0xff]
        %v951 = vld [vmem:[%s935 + $0x78] sm:$0xff]
        %v952 = vld [vmem:[%s935 + $0x80] sm:$0xff]
        %v953 = vld [vmem:[%s935 + $0x88] sm:$0xff]
        %v954 = vld [vmem:[%s935 + $0x90] sm:$0xff]
        %v955 = vld [vmem:[%s935 + $0x98] sm:$0xff]
        %v956 = vld [vmem:[%s935 + $0xa0] sm:$0xff]
        %v957 = vld [vmem:[%s935 + $0xa8] sm:$0xff]
        %v958 = vld [vmem:[%s935 + $0xb0] sm:$0xff]
        %v959 = vld [vmem:[%s935 + $0xb8] sm:$0xff]
        %v960 = vld [vmem:[%s935 + $0xc0] sm:$0xff]
        %v961 = vld [vmem:[%s935 + $0xc8] sm:$0xff]
        %v962 = vld [vmem:[%s935 + $0xd0] sm:$0xff]
        %v963 = vld [vmem:[%s935 + $0xd8] sm:$0xff]
        %v964 = vld [vmem:[%s935 + $0xe0] sm:$0xff]
        %v965 = vld [vmem:[%s935 + $0xe8] sm:$0xff]
        %v966 = vld [vmem:[%s935 + $0xf0] sm:$0xff]
        %v967 = vld [vmem:[%s935 + $0xf8] sm:$0xff]
        %v969 = vsel %vm499, %v937, 0
        %v972 = vsel %vm499, %v939, 0
        %v975 = vsel %vm499, %v941, 0
        %v978 = vsel %vm499, %v943, 0
        %v981 = vsel %vm499, %v945, 0
        %v984 = vsel %vm499, %v947, 0
        %v987 = vsel %vm499, %v949, 0
        %v990 = vsel %vm499, %v951, 0
        %v993 = vsel %vm499, %v953, 0
        %v996 = vsel %vm499, %v955, 0
        %v999 = vsel %vm499, %v957, 0
        %v1002 = vsel %vm499, %v959, 0
        %v1005 = vsel %vm499, %v961, 0
        %v1008 = vsel %vm499, %v963, 0
        %v1011 = vsel %vm499, %v965, 0
        %v1014 = vsel %vm499, %v967, 0
        %1016 = vmatprep.subr.mxu0 0.0
        %1017 = vmatpush1.msra.mxu0 %v448
        %1018 = vmatprep.subr.mxu0 0.0
        %1019 = vmatpush1.msra.mxu0 %v449
        %1020 = vmatprep.subr.mxu0 0.0
        %1021 = vmatpush1.msra.mxu0 %v450
        %1022 = vmatprep.subr.mxu0 0.0
        %1023 = vmatpush1.msra.mxu0 %v451
        %1024 = vmatprep.subr.mxu0 0.0
        %1025 = vmatpush1.msra.mxu0 %v452
        %1026 = vmatprep.subr.mxu0 0.0
        %1027 = vmatpush1.msra.mxu0 %v453
        %1028 = vmatprep.subr.mxu0 0.0
        %1029 = vmatpush1.msra.mxu0 %v454
        %1030 = vmatprep.subr.mxu0 0.0
        %1031 = vmatpush1.msra.mxu0 %v455
        %1032 = vmatprep.subr.mxu0 0.0
        %1033 = vmatpush1.msra.mxu0 %v456
        %1034 = vmatprep.subr.mxu0 0.0
        %1035 = vmatpush1.msra.mxu0 %v457
        %1036 = vmatprep.subr.mxu0 0.0
        %1037 = vmatpush1.msra.mxu0 %v458
        %1038 = vmatprep.subr.mxu0 0.0
        %1039 = vmatpush1.msra.mxu0 %v459
        %1040 = vmatprep.subr.mxu0 0.0
        %1041 = vmatpush1.msra.mxu0 %v460
        %1042 = vmatprep.subr.mxu0 0.0
        %1043 = vmatpush1.msra.mxu0 %v461
        %1044 = vmatprep.subr.mxu0 0.0
        %1045 = vmatpush1.msra.mxu0 %v462
        %1046 = vmatprep.subr.mxu0 0.0
        %1047 = vmatpush1.msra.mxu0 %v463
        %1048 = vmatprep.subr.mxu0 0.0
        %1049 = vmatpush1.msra.mxu0 %v464
        %1050 = vmatprep.subr.mxu0 0.0
        %1051 = vmatpush1.msra.mxu0 %v465
        %1052 = vmatprep.subr.mxu0 0.0
        %1053 = vmatpush1.msra.mxu0 %v466
        %1054 = vmatprep.subr.mxu0 0.0
        %1055 = vmatpush1.msra.mxu0 0.0
        %1056 = vmatprep.subr.mxu0 0.0
        %1057 = vmatpush1.msra.mxu0 0.0
        %1058 = vmatprep.subr.mxu0 0.0
        %1059 = vmatpush1.msra.mxu0 0.0
        %1060 = vmatprep.subr.mxu0 0.0
        %1061 = vmatpush1.msra.mxu0 0.0
        %1062 = vmatprep.subr.mxu0 0.0
        %1063 = vmatpush1.msra.mxu0 0.0
        %1064 = vmatprep.subr.mxu0 0.0
        %1065 = vmatpush1.msra.mxu0 0.0
        %1066 = vmatprep.subr.mxu0 0.0
        %1067 = vmatpush1.msra.mxu0 0.0
        %1068 = vmatprep.subr.mxu0 0.0
        %1069 = vmatpush1.msra.mxu0 0.0
        %1070 = vmatprep.subr.mxu0 0.0
        %1071 = vmatpush1.msra.mxu0 0.0
        %1072 = vmatprep.subr.mxu0 0.0
        %1073 = vmatpush1.msra.mxu0 0.0
        %1074 = vmatprep.subr.mxu0 0.0
        %1075 = vmatpush1.msra.mxu0 0.0
        %1076 = vmatprep.subr.mxu0 0.0
        %1077 = vmatpush1.msra.mxu0 0.0
        %1078 = vmatprep.subr.mxu0 0.0
        %1079 = vmatpush1.msra.mxu0 0.0
        %1080 = vmatprep.mubr.f32.mxu0 %v969
        %1081 = vmatmul.mubr.f32.gmra.mrb[0].mxu0 %v936
        %v1082 = vpop.f32.mrb[0].mxu0
        %v1083 = vadd.f32 0.0, %v1082
        %v1084 = vpop.f32.mrb[0].mxu0
        %1085 = vmatprep.mubr.f32.mxu0 %v972
        %1086 = vmatmul.mubr.f32.gmra.mrb[0].mxu0 %v938
        %v1087 = vpop.f32.mrb[0].mxu0
        %v1088 = vadd.f32 0.0, %v1087
        %v1089 = vpop.f32.mrb[0].mxu0
        %1090 = vmatprep.mubr.f32.mxu0 %v975
        %1091 = vmatmul.mubr.f32.gmra.mrb[0].mxu0 %v940
        %v1092 = vpop.f32.mrb[0].mxu0
        %v1093 = vadd.f32 0.0, %v1092
        %v1094 = vpop.f32.mrb[0].mxu0
        %1095 = vmatprep.mubr.f32.mxu0 %v978
        %1096 = vmatmul.mubr.f32.gmra.mrb[0].mxu0 %v942
        %v1097 = vpop.f32.mrb[0].mxu0
        %v1098 = vadd.f32 0.0, %v1097
        %v1099 = vpop.f32.mrb[0].mxu0
        %1100 = vmatprep.mubr.f32.mxu0 %v981
        %1101 = vmatmul.mubr.f32.gmra.mrb[0].mxu0 %v944
        %v1102 = vpop.f32.mrb[0].mxu0
        %v1103 = vadd.f32 0.0, %v1102
        %v1104 = vpop.f32.mrb[0].mxu0
        %1105 = vmatprep.mubr.f32.mxu0 %v984
        %1106 = vmatmul.mubr.f32.gmra.mrb[0].mxu0 %v946
        %v1107 = vpop.f32.mrb[0].mxu0
        %v1108 = vadd.f32 0.0, %v1107
        %v1109 = vpop.f32.mrb[0].mxu0
        %1110 = vmatprep.mubr.f32.mxu0 %v987
        %1111 = vmatmul.mubr.f32.gmra.mrb[0].mxu0 %v948
        %v1112 = vpop.f32.mrb[0].mxu0
        %v1113 = vadd.f32 0.0, %v1112
        %v1114 = vpop.f32.mrb[0].mxu0
        %1115 = vmatprep.mubr.f32.mxu0 %v990
        %1116 = vmatmul.mubr.f32.gmra.mrb[0].mxu0 %v950
        %v1117 = vpop.f32.mrb[0].mxu0
        %v1118 = vadd.f32 0.0, %v1117
        %v1119 = vpop.f32.mrb[0].mxu0
        %1120 = vmatprep.mubr.f32.mxu0 %v993
        %1121 = vmatmul.mubr.f32.gmra.mrb[0].mxu0 %v952
        %v1122 = vpop.f32.mrb[0].mxu0
        %v1123 = vadd.f32 0.0, %v1122
        %v1124 = vpop.f32.mrb[0].mxu0
        %1125 = vmatprep.mubr.f32.mxu0 %v996
        %1126 = vmatmul.mubr.f32.gmra.mrb[0].mxu0 %v954
        %v1127 = vpop.f32.mrb[0].mxu0
        %v1128 = vadd.f32 0.0, %v1127
        %v1129 = vpop.f32.mrb[0].mxu0
        %1130 = vmatprep.mubr.f32.mxu0 %v999
        %1131 = vmatmul.mubr.f32.gmra.mrb[0].mxu0 %v956
        %v1132 = vpop.f32.mrb[0].mxu0
        %v1133 = vadd.f32 0.0, %v1132
        %v1134 = vpop.f32.mrb[0].mxu0
        %1135 = vmatprep.mubr.f32.mxu0 %v1002
        %1136 = vmatmul.mubr.f32.gmra.mrb[0].mxu0 %v958
        %v1137 = vpop.f32.mrb[0].mxu0
        %v1138 = vadd.f32 0.0, %v1137
        %v1139 = vpop.f32.mrb[0].mxu0
        %1140 = vmatprep.mubr.f32.mxu0 %v1005
        %1141 = vmatmul.mubr.f32.gmra.mrb[0].mxu0 %v960
        %v1142 = vpop.f32.mrb[0].mxu0
        %v1143 = vadd.f32 0.0, %v1142
        %v1144 = vpop.f32.mrb[0].mxu0
        %1145 = vmatprep.mubr.f32.mxu0 %v1008
        %1146 = vmatmul.mubr.f32.gmra.mrb[0].mxu0 %v962
        %v1147 = vpop.f32.mrb[0].mxu0
        %v1148 = vadd.f32 0.0, %v1147
        %v1149 = vpop.f32.mrb[0].mxu0
        %1150 = vmatprep.mubr.f32.mxu0 %v1011
        %1151 = vmatmul.mubr.f32.gmra.mrb[0].mxu0 %v964
        %v1152 = vpop.f32.mrb[0].mxu0
        %v1153 = vadd.f32 0.0, %v1152
        %v1154 = vpop.f32.mrb[0].mxu0
        %1155 = vmatprep.mubr.f32.mxu0 %v1014
        %1156 = vmatmul.mubr.f32.gmra.mrb[0].mxu0 %v966
        %v1157 = vpop.f32.mrb[0].mxu0
        %v1158 = vadd.f32 0.0, %v1157
        %v1159 = vpop.f32.mrb[0].mxu0
        %1160 = vdwg.mxu0
        %v1161 = vmax.f32 %v919, %v1083
        %v1162 = vmax.f32 %v920, %v1088
        %v1163 = vmax.f32 %v921, %v1093
        %v1164 = vmax.f32 %v922, %v1098
        %v1165 = vmax.f32 %v923, %v1103
        %v1166 = vmax.f32 %v924, %v1108
        %v1167 = vmax.f32 %v925, %v1113
        %v1168 = vmax.f32 %v926, %v1118
        %v1169 = vmax.f32 %v927, %v1123
        %v1170 = vmax.f32 %v928, %v1128
        %v1171 = vmax.f32 %v929, %v1133
        %v1172 = vmax.f32 %v930, %v1138
        %v1173 = vmax.f32 %v931, %v1143
        %v1174 = vmax.f32 %v932, %v1148
        %v1175 = vmax.f32 %v933, %v1153
        %v1176 = vmax.f32 %v934, %v1158
        %s1177 = scalar_lea.vmem %s420, 768 [#allocation2]
        %v1178 = vld [vmem:[%s1177] sm:$0xff]
        %v1179 = vld [vmem:[%s1177 + $0x8] sm:$0xff]
        %v1180 = vld [vmem:[%s1177 + $0x10] sm:$0xff]
        %v1181 = vld [vmem:[%s1177 + $0x18] sm:$0xff]
        %v1182 = vld [vmem:[%s1177 + $0x20] sm:$0xff]
        %v1183 = vld [vmem:[%s1177 + $0x28] sm:$0xff]
        %v1184 = vld [vmem:[%s1177 + $0x30] sm:$0xff]
        %v1185 = vld [vmem:[%s1177 + $0x38] sm:$0xff]
        %v1186 = vld [vmem:[%s1177 + $0x40] sm:$0xff]
        %v1187 = vld [vmem:[%s1177 + $0x48] sm:$0xff]
        %v1188 = vld [vmem:[%s1177 + $0x50] sm:$0xff]
        %v1189 = vld [vmem:[%s1177 + $0x58] sm:$0xff]
        %v1190 = vld [vmem:[%s1177 + $0x60] sm:$0xff]
        %v1191 = vld [vmem:[%s1177 + $0x68] sm:$0xff]
        %v1192 = vld [vmem:[%s1177 + $0x70] sm:$0xff]
        %v1193 = vld [vmem:[%s1177 + $0x78] sm:$0xff]
        %v1194 = vld [vmem:[%s1177 + $0x80] sm:$0xff]
        %v1195 = vld [vmem:[%s1177 + $0x88] sm:$0xff]
        %v1196 = vld [vmem:[%s1177 + $0x90] sm:$0xff]
        %v1197 = vld [vmem:[%s1177 + $0x98] sm:$0xff]
        %v1198 = vld [vmem:[%s1177 + $0xa0] sm:$0xff]
        %v1199 = vld [vmem:[%s1177 + $0xa8] sm:$0xff]
        %v1200 = vld [vmem:[%s1177 + $0xb0] sm:$0xff]
        %v1201 = vld [vmem:[%s1177 + $0xb8] sm:$0xff]
        %v1202 = vld [vmem:[%s1177 + $0xc0] sm:$0xff]
        %v1203 = vld [vmem:[%s1177 + $0xc8] sm:$0xff]
        %v1204 = vld [vmem:[%s1177 + $0xd0] sm:$0xff]
        %v1205 = vld [vmem:[%s1177 + $0xd8] sm:$0xff]
        %v1206 = vld [vmem:[%s1177 + $0xe0] sm:$0xff]
        %v1207 = vld [vmem:[%s1177 + $0xe8] sm:$0xff]
        %v1208 = vld [vmem:[%s1177 + $0xf0] sm:$0xff]
        %v1209 = vld [vmem:[%s1177 + $0xf8] sm:$0xff]
        %v1211 = vsel %vm499, %v1179, 0
        %v1214 = vsel %vm499, %v1181, 0
        %v1217 = vsel %vm499, %v1183, 0
        %v1220 = vsel %vm499, %v1185, 0
        %v1223 = vsel %vm499, %v1187, 0
        %v1226 = vsel %vm499, %v1189, 0
        %v1229 = vsel %vm499, %v1191, 0
        %v1232 = vsel %vm499, %v1193, 0
        %v1235 = vsel %vm499, %v1195, 0
        %v1238 = vsel %vm499, %v1197, 0
        %v1241 = vsel %vm499, %v1199, 0
        %v1244 = vsel %vm499, %v1201, 0
        %v1247 = vsel %vm499, %v1203, 0
        %v1250 = vsel %vm499, %v1205, 0
        %v1253 = vsel %vm499, %v1207, 0
        %v1256 = vsel %vm499, %v1209, 0
        %1258 = vmatprep.subr.mxu0 0.0
        %1259 = vmatpush1.msra.mxu0 %v448
        %1260 = vmatprep.subr.mxu0 0.0
        %1261 = vmatpush1.msra.mxu0 %v449
        %1262 = vmatprep.subr.mxu0 0.0
        %1263 = vmatpush1.msra.mxu0 %v450
        %1264 = vmatprep.subr.mxu0 0.0
        %1265 = vmatpush1.msra.mxu0 %v451
        %1266 = vmatprep.subr.mxu0 0.0
        %1267 = vmatpush1.msra.mxu0 %v452
        %1268 = vmatprep.subr.mxu0 0.0
        %1269 = vmatpush1.msra.mxu0 %v453
        %1270 = vmatprep.subr.mxu0 0.0
        %1271 = vmatpush1.msra.mxu0 %v454
        %1272 = vmatprep.subr.mxu0 0.0
        %1273 = vmatpush1.msra.mxu0 %v455
        %1274 = vmatprep.subr.mxu0 0.0
        %1275 = vmatpush1.msra.mxu0 %v456
        %1276 = vmatprep.subr.mxu0 0.0
        %1277 = vmatpush1.msra.mxu0 %v457
        %1278 = vmatprep.subr.mxu0 0.0
        %1279 = vmatpush1.msra.mxu0 %v458
        %1280 = vmatprep.subr.mxu0 0.0
        %1281 = vmatpush1.msra.mxu0 %v459
        %1282 = vmatprep.subr.mxu0 0.0
        %1283 = vmatpush1.msra.mxu0 %v460
        %1284 = vmatprep.subr.mxu0 0.0
        %1285 = vmatpush1.msra.mxu0 %v461
        %1286 = vmatprep.subr.mxu0 0.0
        %1287 = vmatpush1.msra.mxu0 %v462
        %1288 = vmatprep.subr.mxu0 0.0
        %1289 = vmatpush1.msra.mxu0 %v463
        %1290 = vmatprep.subr.mxu0 0.0
        %1291 = vmatpush1.msra.mxu0 %v464
        %1292 = vmatprep.subr.mxu0 0.0
        %1293 = vmatpush1.msra.mxu0 %v465
        %1294 = vmatprep.subr.mxu0 0.0
        %1295 = vmatpush1.msra.mxu0 %v466
        %1296 = vmatprep.subr.mxu0 0.0
        %1297 = vmatpush1.msra.mxu0 0.0
        %1298 = vmatprep.subr.mxu0 0.0
        %1299 = vmatpush1.msra.mxu0 0.0
        %1300 = vmatprep.subr.mxu0 0.0
        %1301 = vmatpush1.msra.mxu0 0.0
        %1302 = vmatprep.subr.mxu0 0.0
        %1303 = vmatpush1.msra.mxu0 0.0
        %1304 = vmatprep.subr.mxu0 0.0
        %1305 = vmatpush1.msra.mxu0 0.0
        %1306 = vmatprep.subr.mxu0 0.0
        %1307 = vmatpush1.msra.mxu0 0.0
        %1308 = vmatprep.subr.mxu0 0.0
        %1309 = vmatpush1.msra.mxu0 0.0
        %1310 = vmatprep.subr.mxu0 0.0
        %1311 = vmatpush1.msra.mxu0 0.0
        %1312 = vmatprep.subr.mxu0 0.0
        %1313 = vmatpush1.msra.mxu0 0.0
        %1314 = vmatprep.subr.mxu0 0.0
        %1315 = vmatpush1.msra.mxu0 0.0
        %1316 = vmatprep.subr.mxu0 0.0
        %1317 = vmatpush1.msra.mxu0 0.0
        %1318 = vmatprep.subr.mxu0 0.0
        %1319 = vmatpush1.msra.mxu0 0.0
        %1320 = vmatprep.subr.mxu0 0.0
        %1321 = vmatpush1.msra.mxu0 0.0
        %1322 = vmatprep.mubr.f32.mxu0 %v1211
        %1323 = vmatmul.mubr.f32.gmra.mrb[0].mxu0 %v1178
        %v1324 = vpop.f32.mrb[0].mxu0
        %v1325 = vadd.f32 0.0, %v1324
        %v1326 = vpop.f32.mrb[0].mxu0
        %1327 = vmatprep.mubr.f32.mxu0 %v1214
        %1328 = vmatmul.mubr.f32.gmra.mrb[0].mxu0 %v1180
        %v1329 = vpop.f32.mrb[0].mxu0
        %v1330 = vadd.f32 0.0, %v1329
        %v1331 = vpop.f32.mrb[0].mxu0
        %1332 = vmatprep.mubr.f32.mxu0 %v1217
        %1333 = vmatmul.mubr.f32.gmra.mrb[0].mxu0 %v1182
        %v1334 = vpop.f32.mrb[0].mxu0
        %v1335 = vadd.f32 0.0, %v1334
        %v1336 = vpop.f32.mrb[0].mxu0
        %1337 = vmatprep.mubr.f32.mxu0 %v1220
        %1338 = vmatmul.mubr.f32.gmra.mrb[0].mxu0 %v1184
        %v1339 = vpop.f32.mrb[0].mxu0
        %v1340 = vadd.f32 0.0, %v1339
        %v1341 = vpop.f32.mrb[0].mxu0
        %1342 = vmatprep.mubr.f32.mxu0 %v1223
        %1343 = vmatmul.mubr.f32.gmra.mrb[0].mxu0 %v1186
        %v1344 = vpop.f32.mrb[0].mxu0
        %v1345 = vadd.f32 0.0, %v1344
        %v1346 = vpop.f32.mrb[0].mxu0
        %1347 = vmatprep.mubr.f32.mxu0 %v1226
        %1348 = vmatmul.mubr.f32.gmra.mrb[0].mxu0 %v1188
        %v1349 = vpop.f32.mrb[0].mxu0
        %v1350 = vadd.f32 0.0, %v1349
        %v1351 = vpop.f32.mrb[0].mxu0
        %1352 = vmatprep.mubr.f32.mxu0 %v1229
        %1353 = vmatmul.mubr.f32.gmra.mrb[0].mxu0 %v1190
        %v1354 = vpop.f32.mrb[0].mxu0
        %v1355 = vadd.f32 0.0, %v1354
        %v1356 = vpop.f32.mrb[0].mxu0
        %1357 = vmatprep.mubr.f32.mxu0 %v1232
        %1358 = vmatmul.mubr.f32.gmra.mrb[0].mxu0 %v1192
        %v1359 = vpop.f32.mrb[0].mxu0
        %v1360 = vadd.f32 0.0, %v1359
        %v1361 = vpop.f32.mrb[0].mxu0
        %1362 = vmatprep.mubr.f32.mxu0 %v1235
        %1363 = vmatmul.mubr.f32.gmra.mrb[0].mxu0 %v1194
        %v1364 = vpop.f32.mrb[0].mxu0
        %v1365 = vadd.f32 0.0, %v1364
        %v1366 = vpop.f32.mrb[0].mxu0
        %1367 = vmatprep.mubr.f32.mxu0 %v1238
        %1368 = vmatmul.mubr.f32.gmra.mrb[0].mxu0 %v1196
        %v1369 = vpop.f32.mrb[0].mxu0
        %v1370 = vadd.f32 0.0, %v1369
        %v1371 = vpop.f32.mrb[0].mxu0
        %1372 = vmatprep.mubr.f32.mxu0 %v1241
        %1373 = vmatmul.mubr.f32.gmra.mrb[0].mxu0 %v1198
        %v1374 = vpop.f32.mrb[0].mxu0
        %v1375 = vadd.f32 0.0, %v1374
        %v1376 = vpop.f32.mrb[0].mxu0
        %1377 = vmatprep.mubr.f32.mxu0 %v1244
        %1378 = vmatmul.mubr.f32.gmra.mrb[0].mxu0 %v1200
        %v1379 = vpop.f32.mrb[0].mxu0
        %v1380 = vadd.f32 0.0, %v1379
        %v1381 = vpop.f32.mrb[0].mxu0
        %1382 = vmatprep.mubr.f32.mxu0 %v1247
        %1383 = vmatmul.mubr.f32.gmra.mrb[0].mxu0 %v1202
        %v1384 = vpop.f32.mrb[0].mxu0
        %v1385 = vadd.f32 0.0, %v1384
        %v1386 = vpop.f32.mrb[0].mxu0
        %1387 = vmatprep.mubr.f32.mxu0 %v1250
        %1388 = vmatmul.mubr.f32.gmra.mrb[0].mxu0 %v1204
        %v1389 = vpop.f32.mrb[0].mxu0
        %v1390 = vadd.f32 0.0, %v1389
        %v1391 = vpop.f32.mrb[0].mxu0
        %1392 = vmatprep.mubr.f32.mxu0 %v1253
        %1393 = vmatmul.mubr.f32.gmra.mrb[0].mxu0 %v1206
        %v1394 = vpop.f32.mrb[0].mxu0
        %v1395 = vadd.f32 0.0, %v1394
        %v1396 = vpop.f32.mrb[0].mxu0
        %1397 = vmatprep.mubr.f32.mxu0 %v1256
        %1398 = vmatmul.mubr.f32.gmra.mrb[0].mxu0 %v1208
        %v1399 = vpop.f32.mrb[0].mxu0
        %v1400 = vadd.f32 0.0, %v1399
        %v1401 = vpop.f32.mrb[0].mxu0
        %1402 = vdwg.mxu0
        %v1403 = vmax.f32 %v1161, %v1325
        %v1404 = vmax.f32 %v1162, %v1330
        %v1405 = vmax.f32 %v1163, %v1335
        %v1406 = vmax.f32 %v1164, %v1340
        %v1407 = vmax.f32 %v1165, %v1345
        %v1408 = vmax.f32 %v1166, %v1350
        %v1409 = vmax.f32 %v1167, %v1355
        %v1410 = vmax.f32 %v1168, %v1360
        %v1411 = vmax.f32 %v1169, %v1365
        %v1412 = vmax.f32 %v1170, %v1370
        %v1413 = vmax.f32 %v1171, %v1375
        %v1414 = vmax.f32 %v1172, %v1380
        %v1415 = vmax.f32 %v1173, %v1385
        %v1416 = vmax.f32 %v1174, %v1390
        %v1417 = vmax.f32 %v1175, %v1395
        %v1418 = vmax.f32 %v1176, %v1400
        %v1419 = vld [vmem:[%s2] sm:$0x1]
        %v1421 = vlaneseq
        %v1422 = vshrl.u32 %v1421, 7
        %v1423 = vsub.s32 0, %v1422
        %v1424 = vrot.slane %v1419, %v1423
        %v1426 = vadd.f32 %v1403, %v1424
        %v1427 = vadd.f32 %v1404, %v1424
        %v1428 = vadd.f32 %v1405, %v1424
        %v1429 = vadd.f32 %v1406, %v1424
        %v1430 = vadd.f32 %v1407, %v1424
        %v1431 = vadd.f32 %v1408, %v1424
        %v1432 = vadd.f32 %v1409, %v1424
        %v1433 = vadd.f32 %v1410, %v1424
        %v1434 = vadd.f32 %v1411, %v1424
        %v1435 = vadd.f32 %v1412, %v1424
        %v1436 = vadd.f32 %v1413, %v1424
        %v1437 = vadd.f32 %v1414, %v1424
        %v1438 = vadd.f32 %v1415, %v1424
        %v1439 = vadd.f32 %v1416, %v1424
        %v1440 = vadd.f32 %v1417, %v1424
        %v1441 = vadd.f32 %v1418, %v1424
        %v1442 = vmax.f32 %v1426, 0.0
        %v1443 = vmax.f32 %v1427, 0.0
        %v1444 = vmax.f32 %v1428, 0.0
        %v1445 = vmax.f32 %v1429, 0.0
        %v1446 = vmax.f32 %v1430, 0.0
        %v1447 = vmax.f32 %v1431, 0.0
        %v1448 = vmax.f32 %v1432, 0.0
        %v1449 = vmax.f32 %v1433, 0.0
        %v1450 = vmax.f32 %v1434, 0.0
        %v1451 = vmax.f32 %v1435, 0.0
        %v1452 = vmax.f32 %v1436, 0.0
        %v1453 = vmax.f32 %v1437, 0.0
        %v1454 = vmax.f32 %v1438, 0.0
        %v1455 = vmax.f32 %v1439, 0.0
        %v1456 = vmax.f32 %v1440, 0.0
        %v1457 = vmax.f32 %v1441, 0.0
        %vm1458 = vcmask 64512
        %1459 = vst.msk [vmem:[%s446] sm:$0xff] %vm1458, %v1442
        %1460 = vst.msk [vmem:[%s446 + $0x8] sm:$0xff] %vm1458, %v1443
        %1461 = vst.msk [vmem:[%s446 + $0x10] sm:$0xff] %vm1458, %v1444
        %1462 = vst.msk [vmem:[%s446 + $0x18] sm:$0xff] %vm1458, %v1445
        %1463 = vst.msk [vmem:[%s446 + $0x20] sm:$0xff] %vm1458, %v1446
        %1464 = vst.msk [vmem:[%s446 + $0x28] sm:$0xff] %vm1458, %v1447
        %1465 = vst.msk [vmem:[%s446 + $0x30] sm:$0xff] %vm1458, %v1448
        %1466 = vst.msk [vmem:[%s446 + $0x38] sm:$0xff] %vm1458, %v1449
        %1467 = vst.msk [vmem:[%s446 + $0x40] sm:$0xff] %vm1458, %v1450
        %1468 = vst.msk [vmem:[%s446 + $0x48] sm:$0xff] %vm1458, %v1451
        %1469 = vst.msk [vmem:[%s446 + $0x50] sm:$0xff] %vm1458, %v1452
        %1470 = vst.msk [vmem:[%s446 + $0x58] sm:$0xff] %vm1458, %v1453
        %1471 = vst.msk [vmem:[%s446 + $0x60] sm:$0xff] %vm1458, %v1454
        %1472 = vst.msk [vmem:[%s446 + $0x68] sm:$0xff] %vm1458, %v1455
        %1473 = vst.msk [vmem:[%s446 + $0x70] sm:$0xff] %vm1458, %v1456
        %1474 = vst.msk [vmem:[%s446 + $0x78] sm:$0xff] %vm1458, %v1457
        %s1475 = smul.u32 16, %s14
        %p1476 = scmp.lt.s32.totalorder %s1475, 31
        %s1477 = scalar_select %p1476, %s1475, 31
        %s1478 = smul.addr %s1477, 8
        %s1479 = scalar_lea.vmem %s3, %s1478
        // Predicated region
        $region56: #{_lambda_.2} parent=50 // pred_check
          %p1480 = pneg %p100
        $region57: #{_lambda_.2} parent=50 // pred_check_branch
          %1482 = sbr.rel (%p1480) target = $region59
        $region58: #{_lambda_.2} parent=50 // pred_region
          %s1483 = smul.u32 16, %s14
        $region59: #{_lambda_.2} parent=50 // pred_fallthru
          _
      $region51: #{_lambda_.2} parent=5 // pred_fallthru
        _
      %p1484 = scmp.le.s32.totalorder 2, %s9
      // Predicated region
      $region60: #{_lambda_.2} parent=5 // pred_check
        %p1485 = pneg %p1484
      $region61: #{_lambda_.2} parent=5 // pred_check_branch
        %1487 = sbr.rel (%p1485) target = $region63
      $region62: #{_lambda_.2} parent=5 // pred_region
        %s1488 = ssub.s32 %s9, 2
        // Predicated region
        $region64: #{_lambda_.2} parent=62 // pred_check
          %p1489 = pneg %p106
        $region65: #{_lambda_.2} parent=62 // pred_check_branch
          %1491 = sbr.rel (%p1489) target = $region67
        $region66: #{_lambda_.2} parent=62 // pred_region
          %s1492 = smul.u32 16, %s15
          %p1493 = scmp.lt.s32.totalorder %s1492, 31
          %s1494 = scalar_select %p1493, %s1492, 31
          %s1495 = smul.addr %s1494, 8
          %s1496 = scalar_lea.vmem %s3, %s1495
        $region67: #{_lambda_.2} parent=62 // pred_fallthru
          _
      $region63: #{_lambda_.2} parent=5 // pred_fallthru
        _
    $region6: #{_lambda_.2} parent=1 // loop_footer
      %s13 = sadd.s32 1, %s9
    $region7: #{_lambda_.2} parent=1 // loop_footer_branch
      %8 = sbr.rel target = $region3
    $region8: #{_lambda_.2} parent=1 // loop_exit
      _

// kernel: _lambda_.3
$region0: #{_lambda_.3}
  #allocation0 [shape = 'u32[]', space=smem, size = 0x4, offset = 0x4, fixed_abs, tag = 'smem constant byte address 0x4 - core index']
  #allocation1 [shape = 'u32[144,128]{1,0:T(1,128)}', space=vmem, size = 0x12000, scoped, tag = 'internal scratch']
  %s0 = inlined_call_operand.vmem [shape: f32[4,512], index: 0, kind: input, shape index: {}]
  %s1 = inlined_call_operand.vmem [shape: f32[512,32], index: 1, kind: input, shape index: {}]
  %s2 = inlined_call_operand.vmem [shape: f32[1,32], index: 2, kind: input, shape index: {}]
  %s3 = inlined_call_operand.vmem [shape: f32[32,10], index: 3, kind: input, shape index: {}]
  %s4 = inlined_call_operand.vmem [shape: f32[1,10], index: 4, kind: input, shape index: {}]
  %s5 = inlined_call_operand.hbm [shape: f32[4,10], index: 5, kind: output, shape index: {}]
  %s6 = sld [smem:[#allocation0]]
  $region30: #{_lambda_.3} parent=0
    _
  %s8 = ssub.s32 1, %s6
  %s9 = scalar_select 0, %s8, %s6
  $region1: #{_lambda_.3} parent=0
    #allocation2 [shape = 'u8[2048]{0}', space=vmem, size = 0x800, scoped, tag = 'output window, operand 0, single buffered']
    #allocation3 [shape = 's32[1]{0}', space=sflag, size = 0x4, scoped, tag = 'scoped memory for _lambda_.3']
    %10 = vsyncpa [#allocation3], 0
    // Predicated region
    $region2: #{_lambda_.3} parent=1 // pred_check
      _
    $region3: #{_lambda_.3} parent=1 // pred_check_branch
      %12 = sbr.rel (0) target = $region5
    $region4: #{_lambda_.3} parent=1 // pred_region
      _
    $region5: #{_lambda_.3} parent=1 // pred_fallthru
      _
    // Predicated region
    $region6: #{_lambda_.3} parent=1 // pred_check
      _
    $region7: #{_lambda_.3} parent=1 // pred_check_branch
      %14 = sbr.rel (0) target = $region9
    $region8: #{_lambda_.3} parent=1 // pred_region
      _
    $region9: #{_lambda_.3} parent=1 // pred_fallthru
      _
    // Predicated region
    $region10: #{_lambda_.3} parent=1 // pred_check
      _
    $region11: #{_lambda_.3} parent=1 // pred_check_branch
      %16 = sbr.rel (0) target = $region13
    $region12: #{_lambda_.3} parent=1 // pred_region
      _
    $region13: #{_lambda_.3} parent=1 // pred_fallthru
      _
    // Predicated region
    $region14: #{_lambda_.3} parent=1 // pred_check
      _
    $region15: #{_lambda_.3} parent=1 // pred_check_branch
      %18 = sbr.rel (0) target = $region17
    $region16: #{_lambda_.3} parent=1 // pred_region
      _
    $region17: #{_lambda_.3} parent=1 // pred_fallthru
      _
    // Predicated region
    $region18: #{_lambda_.3} parent=1 // pred_check
      _
    $region19: #{_lambda_.3} parent=1 // pred_check_branch
      %20 = sbr.rel (0) target = $region21
    $region20: #{_lambda_.3} parent=1 // pred_region
      _
    $region21: #{_lambda_.3} parent=1 // pred_fallthru
      _
    %v21 = vld [vmem:[%s0] sm:$0xff]
    %v22 = vld [vmem:[%s0 + $0x8] sm:$0xff]
    %v23 = vld [vmem:[%s1] sm:$0xff]
    %v24 = vld [vmem:[%s1 + $0x8] sm:$0xff]
    %v25 = vld [vmem:[%s1 + $0x10] sm:$0xff]
    %v26 = vld [vmem:[%s1 + $0x18] sm:$0xff]
    %v27 = vld [vmem:[%s1 + $0x20] sm:$0xff]
    %v28 = vld [vmem:[%s1 + $0x28] sm:$0xff]
    %v29 = vld [vmem:[%s1 + $0x30] sm:$0xff]
    %v30 = vld [vmem:[%s1 + $0x38] sm:$0xff]
    %v31 = vld [vmem:[%s1 + $0x40] sm:$0xff]
    %v32 = vld [vmem:[%s1 + $0x48] sm:$0xff]
    %v33 = vld [vmem:[%s1 + $0x50] sm:$0xff]
    %v34 = vld [vmem:[%s1 + $0x58] sm:$0xff]
    %v35 = vld [vmem:[%s1 + $0x60] sm:$0xff]
    %v36 = vld [vmem:[%s1 + $0x68] sm:$0xff]
    %v37 = vld [vmem:[%s1 + $0x70] sm:$0xff]
    %v38 = vld [vmem:[%s1 + $0x78] sm:$0xff]
    %v39 = vld [vmem:[%s1 + $0x80] sm:$0xff]
    %v40 = vld [vmem:[%s1 + $0x88] sm:$0xff]
    %v41 = vld [vmem:[%s1 + $0x90] sm:$0xff]
    %v42 = vld [vmem:[%s1 + $0x98] sm:$0xff]
    %v43 = vld [vmem:[%s1 + $0xa0] sm:$0xff]
    %v44 = vld [vmem:[%s1 + $0xa8] sm:$0xff]
    %v45 = vld [vmem:[%s1 + $0xb0] sm:$0xff]
    %v46 = vld [vmem:[%s1 + $0xb8] sm:$0xff]
    %v47 = vld [vmem:[%s1 + $0xc0] sm:$0xff]
    %v48 = vld [vmem:[%s1 + $0xc8] sm:$0xff]
    %v49 = vld [vmem:[%s1 + $0xd0] sm:$0xff]
    %v50 = vld [vmem:[%s1 + $0xd8] sm:$0xff]
    %v51 = vld [vmem:[%s1 + $0xe0] sm:$0xff]
    %v52 = vld [vmem:[%s1 + $0xe8] sm:$0xff]
    %v53 = vld [vmem:[%s1 + $0xf0] sm:$0xff]
    %v54 = vld [vmem:[%s1 + $0xf8] sm:$0xff]
    %v55 = vld [vmem:[%s1 + $0x100] sm:$0xff]
    %v56 = vld [vmem:[%s1 + $0x108] sm:$0xff]
    %v57 = vld [vmem:[%s1 + $0x110] sm:$0xff]
    %v58 = vld [vmem:[%s1 + $0x118] sm:$0xff]
    %v59 = vld [vmem:[%s1 + $0x120] sm:$0xff]
    %v60 = vld [vmem:[%s1 + $0x128] sm:$0xff]
    %v61 = vld [vmem:[%s1 + $0x130] sm:$0xff]
    %v62 = vld [vmem:[%s1 + $0x138] sm:$0xff]
    %v63 = vld [vmem:[%s1 + $0x140] sm:$0xff]
    %v64 = vld [vmem:[%s1 + $0x148] sm:$0xff]
    %v65 = vld [vmem:[%s1 + $0x150] sm:$0xff]
    %v66 = vld [vmem:[%s1 + $0x158] sm:$0xff]
    %v67 = vld [vmem:[%s1 + $0x160] sm:$0xff]
    %v68 = vld [vmem:[%s1 + $0x168] sm:$0xff]
    %v69 = vld [vmem:[%s1 + $0x170] sm:$0xff]
    %v70 = vld [vmem:[%s1 + $0x178] sm:$0xff]
    %v71 = vld [vmem:[%s1 + $0x180] sm:$0xff]
    %v72 = vld [vmem:[%s1 + $0x188] sm:$0xff]
    %v73 = vld [vmem:[%s1 + $0x190] sm:$0xff]
    %v74 = vld [vmem:[%s1 + $0x198] sm:$0xff]
    %v75 = vld [vmem:[%s1 + $0x1a0] sm:$0xff]
    %v76 = vld [vmem:[%s1 + $0x1a8] sm:$0xff]
    %v77 = vld [vmem:[%s1 + $0x1b0] sm:$0xff]
    %v78 = vld [vmem:[%s1 + $0x1b8] sm:$0xff]
    %v79 = vld [vmem:[%s1 + $0x1c0] sm:$0xff]
    %v80 = vld [vmem:[%s1 + $0x1c8] sm:$0xff]
    %v81 = vld [vmem:[%s1 + $0x1d0] sm:$0xff]
    %v82 = vld [vmem:[%s1 + $0x1d8] sm:$0xff]
    %v83 = vld [vmem:[%s1 + $0x1e0] sm:$0xff]
    %v84 = vld [vmem:[%s1 + $0x1e8] sm:$0xff]
    %v85 = vld [vmem:[%s1 + $0x1f0] sm:$0xff]
    %v86 = vld [vmem:[%s1 + $0x1f8] sm:$0xff]
    %v87 = vld [vmem:[%s2] sm:$0x1]
    %v89 = vlaneseq
    %v90 = vshrl.u32 %v89, 7
    %v91 = vsub.s32 0, %v90
    %v92 = vrot.slane %v87, %v91
    %v96 = vcombine.high %v21, %v21
    %v97 = vcombine.high %v22, %v22
    %100 = vmatprep.subr.mxu0 0.0
    %101 = vmatpush1.msra.mxu0 %v23
    %102 = vmatprep.subr.mxu0 0.0
    %103 = vmatpush1.msra.mxu0 %v24
    %104 = vmatprep.subr.mxu0 0.0
    %105 = vmatpush1.msra.mxu0 %v25
    %106 = vmatprep.subr.mxu0 0.0
    %107 = vmatpush1.msra.mxu0 %v26
    %108 = vmatprep.subr.mxu0 0.0
    %109 = vmatpush1.msra.mxu0 %v27
    %110 = vmatprep.subr.mxu0 0.0
    %111 = vmatpush1.msra.mxu0 %v28
    %112 = vmatprep.subr.mxu0 0.0
    %113 = vmatpush1.msra.mxu0 %v29
    %114 = vmatprep.subr.mxu0 0.0
    %115 = vmatpush1.msra.mxu0 %v30
    %116 = vmatprep.subr.mxu0 0.0
    %117 = vmatpush1.msra.mxu0 %v31
    %118 = vmatprep.subr.mxu0 0.0
    %119 = vmatpush1.msra.mxu0 %v32
    %120 = vmatprep.subr.mxu0 0.0
    %121 = vmatpush1.msra.mxu0 %v33
    %122 = vmatprep.subr.mxu0 0.0
    %123 = vmatpush1.msra.mxu0 %v34
    %124 = vmatprep.subr.mxu0 0.0
    %125 = vmatpush1.msra.mxu0 %v35
    %126 = vmatprep.subr.mxu0 0.0
    %127 = vmatpush1.msra.mxu0 %v36
    %128 = vmatprep.subr.mxu0 0.0
    %129 = vmatpush1.msra.mxu0 %v37
    %130 = vmatprep.subr.mxu0 0.0
    %131 = vmatpush1.msra.mxu0 %v38
    %132 = vmatprep.subr.mxu0 0.0
    %133 = vmatpush1.msra.mxu0 %v39
    %134 = vmatprep.subr.mxu0 0.0
    %135 = vmatpush1.msra.mxu0 %v40
    %136 = vmatprep.subr.mxu0 0.0
    %137 = vmatpush1.msra.mxu0 %v41
    %138 = vmatprep.subr.mxu0 0.0
    %139 = vmatpush1.msra.mxu0 %v42
    %140 = vmatprep.subr.mxu0 0.0
    %141 = vmatpush1.msra.mxu0 %v43
    %142 = vmatprep.subr.mxu0 0.0
    %143 = vmatpush1.msra.mxu0 %v44
    %144 = vmatprep.subr.mxu0 0.0
    %145 = vmatpush1.msra.mxu0 %v45
    %146 = vmatprep.subr.mxu0 0.0
    %147 = vmatpush1.msra.mxu0 %v46
    %148 = vmatprep.subr.mxu0 0.0
    %149 = vmatpush1.msra.mxu0 %v47
    %150 = vmatprep.subr.mxu0 0.0
    %151 = vmatpush1.msra.mxu0 %v48
    %152 = vmatprep.subr.mxu0 0.0
    %153 = vmatpush1.msra.mxu0 %v49
    %154 = vmatprep.subr.mxu0 0.0
    %155 = vmatpush1.msra.mxu0 %v50
    %156 = vmatprep.subr.mxu0 0.0
    %157 = vmatpush1.msra.mxu0 %v51
    %158 = vmatprep.subr.mxu0 0.0
    %159 = vmatpush1.msra.mxu0 %v52
    %160 = vmatprep.subr.mxu0 0.0
    %161 = vmatpush1.msra.mxu0 %v53
    %162 = vmatprep.subr.mxu0 0.0
    %163 = vmatpush1.msra.mxu0 %v54
    %164 = vmatprep.mubr.f32.mxu0 %v96
    %165 = vmatmul.mubr.f32.gmra.mrb[0].mxu0 %v21
    %v166 = vpop.f32.mrb[0].mxu0
    %v167 = vadd.f32 %v92, %v166
    %v168 = vpop.f32.mrb[0].mxu0
    %169 = vdwg.mxu0
    %170 = vmatprep.subr.mxu0 0.0
    %171 = vmatpush1.msra.mxu0 %v55
    %172 = vmatprep.subr.mxu0 0.0
    %173 = vmatpush1.msra.mxu0 %v56
    %174 = vmatprep.subr.mxu0 0.0
    %175 = vmatpush1.msra.mxu0 %v57
    %176 = vmatprep.subr.mxu0 0.0
    %177 = vmatpush1.msra.mxu0 %v58
    %178 = vmatprep.subr.mxu0 0.0
    %179 = vmatpush1.msra.mxu0 %v59
    %180 = vmatprep.subr.mxu0 0.0
    %181 = vmatpush1.msra.mxu0 %v60
    %182 = vmatprep.subr.mxu0 0.0
    %183 = vmatpush1.msra.mxu0 %v61
    %184 = vmatprep.subr.mxu0 0.0
    %185 = vmatpush1.msra.mxu0 %v62
    %186 = vmatprep.subr.mxu0 0.0
    %187 = vmatpush1.msra.mxu0 %v63
    %188 = vmatprep.subr.mxu0 0.0
    %189 = vmatpush1.msra.mxu0 %v64
    %190 = vmatprep.subr.mxu0 0.0
    %191 = vmatpush1.msra.mxu0 %v65
    %192 = vmatprep.subr.mxu0 0.0
    %193 = vmatpush1.msra.mxu0 %v66
    %194 = vmatprep.subr.mxu0 0.0
    %195 = vmatpush1.msra.mxu0 %v67
    %196 = vmatprep.subr.mxu0 0.0
    %197 = vmatpush1.msra.mxu0 %v68
    %198 = vmatprep.subr.mxu0 0.0
    %199 = vmatpush1.msra.mxu0 %v69
    %200 = vmatprep.subr.mxu0 0.0
    %201 = vmatpush1.msra.mxu0 %v70
    %202 = vmatprep.subr.mxu0 0.0
    %203 = vmatpush1.msra.mxu0 %v71
    %204 = vmatprep.subr.mxu0 0.0
    %205 = vmatpush1.msra.mxu0 %v72
    %206 = vmatprep.subr.mxu0 0.0
    %207 = vmatpush1.msra.mxu0 %v73
    %208 = vmatprep.subr.mxu0 0.0
    %209 = vmatpush1.msra.mxu0 %v74
    %210 = vmatprep.subr.mxu0 0.0
    %211 = vmatpush1.msra.mxu0 %v75
    %212 = vmatprep.subr.mxu0 0.0
    %213 = vmatpush1.msra.mxu0 %v76
    %214 = vmatprep.subr.mxu0 0.0
    %215 = vmatpush1.msra.mxu0 %v77
    %216 = vmatprep.subr.mxu0 0.0
    %217 = vmatpush1.msra.mxu0 %v78
    %218 = vmatprep.subr.mxu0 0.0
    %219 = vmatpush1.msra.mxu0 %v79
    %220 = vmatprep.subr.mxu0 0.0
    %221 = vmatpush1.msra.mxu0 %v80
    %222 = vmatprep.subr.mxu0 0.0
    %223 = vmatpush1.msra.mxu0 %v81
    %224 = vmatprep.subr.mxu0 0.0
    %225 = vmatpush1.msra.mxu0 %v82
    %226 = vmatprep.subr.mxu0 0.0
    %227 = vmatpush1.msra.mxu0 %v83
    %228 = vmatprep.subr.mxu0 0.0
    %229 = vmatpush1.msra.mxu0 %v84
    %230 = vmatprep.subr.mxu0 0.0
    %231 = vmatpush1.msra.mxu0 %v85
    %232 = vmatprep.subr.mxu0 0.0
    %233 = vmatpush1.msra.mxu0 %v86
    %234 = vmatprep.mubr.f32.mxu0 %v97
    %235 = vmatmul.mubr.f32.gmra.mrb[0].mxu0 %v22
    %v236 = vpop.f32.mrb[0].mxu0
    %v237 = vadd.f32 %v167, %v236
    %v238 = vpop.f32.mrb[0].mxu0
    %239 = vdwg.mxu0
    %v240 = vmax.f32 %v237, 0.0
    %v241 = vld [vmem:[%s3] sm:$0xff]
    %v242 = vld [vmem:[%s3 + $0x8] sm:$0xff]
    %v243 = vld [vmem:[%s3 + $0x10] sm:$0xff]
    %v244 = vld [vmem:[%s3 + $0x18] sm:$0xff]
    %v245 = vld [vmem:[%s4] sm:$0x1]
    %v247 = vlaneseq
    %v248 = vshrl.u32 %v247, 7
    %v249 = vsub.s32 0, %v248
    %v250 = vrot.slane %v245, %v249
    %vm252 = vcmask 261120
    %v254 = vsel %vm252, %v240, 0
    %256 = vmatprep.subr.mxu0 0.0
    %257 = vmatpush1.msra.mxu0 %v241
    %258 = vmatprep.subr.mxu0 0.0
    %259 = vmatpush1.msra.mxu0 %v242
    %260 = vmatprep.subr.mxu0 0.0
    %261 = vmatpush1.msra.mxu0 %v243
    %262 = vmatprep.subr.mxu0 0.0
    %263 = vmatpush1.msra.mxu0 %v244
    %264 = vmatprep.subr.mxu0 0.0
    %265 = vmatpush1.msra.mxu0 0.0
    %266 = vmatprep.subr.mxu0 0.0
    %267 = vmatpush1.msra.mxu0 0.0
    %268 = vmatprep.subr.mxu0 0.0
    %269 = vmatpush1.msra.mxu0 0.0
    %270 = vmatprep.subr.mxu0 0.0
    %271 = vmatpush1.msra.mxu0 0.0
    %272 = vmatprep.subr.mxu0 0.0
    %273 = vmatpush1.msra.mxu0 0.0
    %274 = vmatprep.subr.mxu0 0.0
    %275 = vmatpush1.msra.mxu0 0.0
    %276 = vmatprep.subr.mxu0 0.0
    %277 = vmatpush1.msra.mxu0 0.0
    %278 = vmatprep.subr.mxu0 0.0
    %279 = vmatpush1.msra.mxu0 0.0
    %280 = vmatprep.subr.mxu0 0.0
    %281 = vmatpush1.msra.mxu0 0.0
    %282 = vmatprep.subr.mxu0 0.0
    %283 = vmatpush1.msra.mxu0 0.0
    %284 = vmatprep.subr.mxu0 0.0
    %285 = vmatpush1.msra.mxu0 0.0
    %286 = vmatprep.subr.mxu0 0.0
    %287 = vmatpush1.msra.mxu0 0.0
    %288 = vmatprep.subr.mxu0 0.0
    %289 = vmatpush1.msra.mxu0 0.0
    %290 = vmatprep.subr.mxu0 0.0
    %291 = vmatpush1.msra.mxu0 0.0
    %292 = vmatprep.subr.mxu0 0.0
    %293 = vmatpush1.msra.mxu0 0.0
    %294 = vmatprep.subr.mxu0 0.0
    %295 = vmatpush1.msra.mxu0 0.0
    %296 = vmatprep.subr.mxu0 0.0
    %297 = vmatpush1.msra.mxu0 0.0
    %298 = vmatprep.subr.mxu0 0.0
    %299 = vmatpush1.msra.mxu0 0.0
    %300 = vmatprep.subr.mxu0 0.0
    %301 = vmatpush1.msra.mxu0 0.0
    %302 = vmatprep.subr.mxu0 0.0
    %303 = vmatpush1.msra.mxu0 0.0
    %304 = vmatprep.subr.mxu0 0.0
    %305 = vmatpush1.msra.mxu0 0.0
    %306 = vmatprep.subr.mxu0 0.0
    %307 = vmatpush1.msra.mxu0 0.0
    %308 = vmatprep.subr.mxu0 0.0
    %309 = vmatpush1.msra.mxu0 0.0
    %310 = vmatprep.subr.mxu0 0.0
    %311 = vmatpush1.msra.mxu0 0.0
    %312 = vmatprep.subr.mxu0 0.0
    %313 = vmatpush1.msra.mxu0 0.0
    %314 = vmatprep.subr.mxu0 0.0
    %315 = vmatpush1.msra.mxu0 0.0
    %316 = vmatprep.subr.mxu0 0.0
    %317 = vmatpush1.msra.mxu0 0.0
    %318 = vmatprep.subr.mxu0 0.0
    %319 = vmatpush1.msra.mxu0 0.0
    %320 = vmatprep.mubr.f32.mxu0 0.0
    %321 = vmatmul.mubr.f32.gmra.mrb[0].mxu0 %v254
    %v322 = vpop.f32.mrb[0].mxu0
    %v323 = vadd.f32 %v250, %v322
    %v324 = vpop.f32.mrb[0].mxu0
    %325 = vdwg.mxu0
    %vm326 = vcmask 76800
    %327 = vst.msk [vmem:[#allocation2] sm:$0xf] %vm326, %v323
    // Predicated region
    $region22: #{_lambda_.3} parent=1 // pred_check
      _
    $region23: #{_lambda_.3} parent=1 // pred_check_branch
      %329 = sbr.rel (0) target = $region25
    $region24: #{_lambda_.3} parent=1 // pred_region
      %s331 = ssub.s32 64, 64
      %332 = vsyncadd [#allocation3], %s331
      %s334 = sshll.u32 [#allocation2], 4
      %s335 = int_to_ptr.vmem [resolvable:$true] %s334
      %337 = dma.vmem_to_hbm [thread:$0]  %s335, 64, %s5, [#allocation3]
    $region25: #{_lambda_.3} parent=1 // pred_fallthru
      _
    // Predicated region
    $region26: #{_lambda_.3} parent=1 // pred_check
      _
    $region27: #{_lambda_.3} parent=1 // pred_check_branch
      %339 = sbr.rel (0) target = $region29
    $region28: #{_lambda_.3} parent=1 // pred_region
      %340 = dma.done [#allocation3], 64
    $region29: #{_lambda_.3} parent=1 // pred_fallthru
      _
    %341 = vsyncpa [#allocation3], 1

</llo_original>
